<compile_context>
chip_gen: v6e
topology: v6e:2x2x1
jax: 0.10.0
libtpu: 0.0.40
codegen_flags: <defaults>
</compile_context>

<pallas_src>
import functools

import jax
import jax.numpy as jnp
from jax.experimental import pallas as pl
from jax.experimental.pallas import tpu as pltpu

BN_EPS = 1e-5


# ----------------------------------------------------------------------------
# Fused kernel (gridless): both views + fused loss in one basic block.
# ----------------------------------------------------------------------------
def rcc_fused_kernel(x1_ref, x2_ref,
                     w1_ref, g1_ref, b1_ref,
                     w2_hbm, w3_hbm, g3_ref, b3_ref, w4_hbm, b4_ref,
                     loss_ref, sim_ref, qnorm_ref,
                     w2_vmem, w3_vmem, w4_vmem, dma_sems,
                     *, tau1, tau2, scale):
    f32 = jnp.float32
    bf16 = jnp.bfloat16

    # Kick off the HBM->VMEM fetch of the later-layer weights immediately so it
    # overlaps with the first matmuls (w1/x/BN-params are auto-copied already).
    cp_w2 = pltpu.make_async_copy(w2_hbm, w2_vmem, dma_sems.at[0])
    cp_w3 = pltpu.make_async_copy(w3_hbm, w3_vmem, dma_sems.at[1])
    cp_w4 = pltpu.make_async_copy(w4_hbm, w4_vmem, dma_sems.at[2])
    cp_w2.start()
    cp_w3.start()
    cp_w4.start()

    g1 = g1_ref[...]
    b1 = b1_ref[...]
    g3 = g3_ref[...]
    b3 = b3_ref[...]
    b4 = b4_ref[...]

    def bn(h, gamma=None, beta=None, relu=False):
        # One-pass BatchNorm1d (training stats, biased variance, eps=1e-5) with
        # the affine transform folded in: y = h*a + c.
        mean = jnp.mean(h, axis=0, keepdims=True)
        ex2 = jnp.mean(h * h, axis=0, keepdims=True)
        var = jnp.maximum(ex2 - mean * mean, 0.0)
        a = jax.lax.rsqrt(var + BN_EPS)
        if gamma is not None:
            a = a * gamma
        c = (beta - mean * a) if beta is not None else (-mean * a)
        y = h * a + c
        return jnp.maximum(y, 0.0) if relu else y

    def l2n(x):
        # F.normalize(dim=1): x / max(||x||, 1e-12)  (rsqrt -> EUP slot).
        ss = jnp.sum(x * x, axis=1, keepdims=True)
        return x * jax.lax.rsqrt(jnp.maximum(ss, 1e-24))

    def softmax_rows(qn):
        # qn is unit-L2-normalized => |logits| <= 1/tau2, so max-subtraction is
        # safe to skip in f32.  Exact reciprocal ((B,1) divides are trivial).
        e = jnp.exp(qn * (1.0 / tau2))
        return e * (1.0 / jnp.sum(e, axis=1, keepdims=True))

    def branch(x_bf16, first):
        # proj: Linear(no bias) -> BN -> ReLU -> Linear(no bias) -> BN(affine=False)
        h = jnp.dot(x_bf16, w1_ref[...], preferred_element_type=f32)
        h = bn(h, g1, b1, relu=True)
        if first:
            cp_w2.wait()
        z = jnp.dot(h.astype(bf16), w2_vmem[...], preferred_element_type=f32)
        z = bn(z)                          # q = proj(x); detach is a fwd no-op
        # pred: Linear(no bias) -> BN -> ReLU -> Linear(+bias)
        if first:
            cp_w3.wait()
        h2 = jnp.dot(z.astype(bf16), w3_vmem[...], preferred_element_type=f32)
        h2 = bn(h2, g3, b3, relu=True)
        if first:
            cp_w4.wait()
        p = jnp.dot(h2.astype(bf16), w4_vmem[...], preferred_element_type=f32) + b4
        return z, p

    need_mce = scale > 0.0             # static (host-side warmup scale) =>
    need_sim = scale < 1.0             # dead loss branches pruned at trace time

    # ---------------- view 1 ----------------
    q1, p1 = branch(x1_ref[...].astype(bf16), first=True)
    # Keep only the bf16 quantities the loss needs; the f32 (B,cout) q1/p1
    # slabs die before view 2 runs (halves the carried footprint).
    p1n = l2n(p1).astype(bf16)
    q1n_f = l2n(q1)
    qs1 = softmax_rows(q1n_f).astype(bf16) if need_mce else None
    q1n = q1n_f.astype(bf16) if need_sim else None

    # ---------------- view 2 ----------------
    # (one basic block: the scheduler interleaves view-1 normalize/softmax
    #  VPU/EUP/XLU work with these MXU matmuls)
    q2, p2 = branch(x2_ref[...].astype(bf16), first=False)
    q2n = l2n(q2)                       # consumed immediately -> stays f32
    p2n = l2n(p2)
    qs2 = softmax_rows(q2n)             # always needed (qnorm output)

    # ---------------- fused loss ----------------
    def mean_rowsum(a, b):              # mean_i sum_j a_ij*b_ij -> (1,1) f32
        prod = a.astype(f32) * b.astype(f32)
        return jnp.mean(jnp.sum(prod, axis=1, keepdims=True),
                        axis=0, keepdims=True)

    cos12 = mean_rowsum(p1n, q2n)       # outputs['sim'] = cos(p1, q2).mean()
    qnorm = jnp.mean(jnp.sqrt(jnp.sum(qs2 * qs2, axis=1, keepdims=True)),
                     axis=0, keepdims=True)

    loss = jnp.zeros((1, 1), f32)
    if need_mce:
        mce12 = -mean_rowsum(qs2, p1n) * (1.0 / tau1)    # mce(p1, q2)
        mce21 = -mean_rowsum(qs1, p2n) * (1.0 / tau1)    # mce(p2, q1)
        loss = loss + scale * 0.5 * (mce12 + mce21)
    if need_sim:
        cos21 = mean_rowsum(p2n, q1n)
        loss = loss + (1.0 - scale) * (-0.5) * (cos12 + cos21)

    loss_ref[...] = loss
    sim_ref[...] = cos12
    qnorm_ref[...] = qnorm


# ----------------------------------------------------------------------------
# Host-side helpers
# ----------------------------------------------------------------------------
def _physical_vmem_bytes():
    try:
        return int(pltpu.get_tpu_info().vmem_capacity_bytes)
    except Exception:
        return 64 * 1024 * 1024        # conservative (v7x per-core VMEM)


def prepare_params(params):
    """One-time bf16 cast of the matmul weights.  Keep the result in the train
    state; re-casting every step costs more HBM traffic than the kernel."""
    out = dict(params)
    for k in ("w1", "w2", "w3", "w4"):
        out[k] = params[k].astype(jnp.bfloat16)
    return out


def rcc_head_forward(x1, x2, params, *, tau1=0.1, tau2=0.05,
                     warmup_epoch=(0, 0), global_epoch=0):
    B, cin = x1.shape
    cout = params["w1"].shape[1]
    hidden = params["w3"].shape[1]

    for k in ("w1", "w2", "w3", "w4"):
        if params[k].dtype != jnp.bfloat16:
            raise ValueError(
                f"params['{k}'] must already be bfloat16 (run prepare_params "
                "once outside the step loop; no per-call cast is emitted).")

    # warmup scale (host-side glue; `train.global_epoch` is external).
    w_lo, w_hi = warmup_epoch
    if global_epoch < w_lo:
        scale = 0.0
    elif global_epoch < w_hi:
        scale = (global_epoch - w_lo) / float(w_hi - w_lo)
    else:
        scale = 1.0

    # VMEM budget derived from the actual shapes (weights are single-buffered
    # because the call is gridless), capped below physical VMEM for headroom.
    x_bytes = x1.dtype.itemsize
    est = (2 * (cin * cout + cout * cout + cout * hidden + hidden * cout)   # bf16 weights
           + 2 * B * cin * x_bytes                                          # x1, x2
           + 5 * B * cout * 4 + 2 * B * hidden * 4                          # f32 activation slabs
           + 3 * B * cout * 2)                                              # bf16 loss carries
    vmem_limit = int(min(max(est * 7 // 5, 16 * 1024 * 1024),
                         _physical_vmem_bytes() * 7 // 8))

    vmem_spec = pl.BlockSpec(memory_space=pltpu.MemorySpace.VMEM)
    hbm_spec = pl.BlockSpec(memory_space=pl.ANY)

    kernel = functools.partial(rcc_fused_kernel, tau1=float(tau1),
                               tau2=float(tau2), scale=float(scale))

    loss, sim, qnorm = pl.pallas_call(
        kernel,
        out_shape=(jax.ShapeDtypeStruct((1, 1), jnp.float32),) * 3,
        in_specs=[
            vmem_spec, vmem_spec,                 # x1, x2 (cast to bf16 in-kernel)
            vmem_spec, vmem_spec, vmem_spec,      # w1, g1, b1
            hbm_spec,                             # w2 -> manual overlapped DMA
            hbm_spec,                             # w3 -> manual overlapped DMA
            vmem_spec, vmem_spec,                 # g3, b3
            hbm_spec,                             # w4 -> manual overlapped DMA
            vmem_spec,                            # b4
        ],
        out_specs=(vmem_spec, vmem_spec, vmem_spec),
        scratch_shapes=[
            pltpu.VMEM((cout, cout), jnp.bfloat16),     # w2 landing buffer
            pltpu.VMEM((cout, hidden), jnp.bfloat16),   # w3 landing buffer
            pltpu.VMEM((hidden, cout), jnp.bfloat16),   # w4 landing buffer
            pltpu.SemaphoreType.DMA((3,)),
        ],
        compiler_params=pltpu.CompilerParams(vmem_limit_bytes=vmem_limit),
    )(x1, x2,
      params["w1"], params["g1"], params["b1"],
      params["w2"], params["w3"], params["g3"], params["b3"],
      params["w4"], params["b4"])

    return {"loss": loss[0, 0], "sim": sim[0, 0], "qnorm": qnorm[0, 0]}


# ----------------------------------------------------------------------------
# Deterministic synthetic parameter init (f32 "master" weights, as a training
# state would hold them).  Linear weights are stored pre-transposed (in, out).
# ----------------------------------------------------------------------------
def init_params(key, cin, hidden, cout):
    k1, k2, k3, k4, k5 = jax.random.split(key, 5)
    return {
        "w1": 0.05 * jax.random.normal(k1, (cin, cout), jnp.float32),
        "g1": jnp.ones((1, cout), jnp.float32),
        "b1": jnp.zeros((1, cout), jnp.float32),
        "w2": 0.05 * jax.random.normal(k2, (cout, cout), jnp.float32),
        "w3": 0.05 * jax.random.normal(k3, (cout, hidden), jnp.float32),
        "g3": jnp.ones((1, hidden), jnp.float32),
        "b3": jnp.zeros((1, hidden), jnp.float32),
        "w4": 0.05 * jax.random.normal(k4, (hidden, cout), jnp.float32),
        "b4": 0.01 * jax.random.normal(k5, (1, cout), jnp.float32),
    }


# ----------------------------------------------------------------------------
# Pure-JAX reference.  mirror_kernel=True mirrors the kernel's numerics (bf16
# MXU operands / f32 accumulation, bf16 carries of the view-1 loss tensors);
# mirror_kernel=False is the full-f32 PyTorch-equivalent math.
# ----------------------------------------------------------------------------
def reference_forward(x1, x2, P, tau1=0.1, tau2=0.05, scale=1.0,
                      mirror_kernel=False):
    hp = jax.lax.Precision.HIGHEST
    mdt = jnp.bfloat16 if mirror_kernel else jnp.float32

    def mm(a, b):
        return jnp.dot(a.astype(mdt), b.astype(mdt),
                       preferred_element_type=jnp.float32, precision=hp)

    def bn(h, g=None, b=None):
        m = h.mean(0, keepdims=True)
        v = ((h - m) ** 2).mean(0, keepdims=True)
        y = (h - m) / jnp.sqrt(v + BN_EPS)
        return y * g + b if g is not None else y

    def branch(x):
        h = jnp.maximum(bn(mm(x, P["w1"]), P["g1"], P["b1"]), 0.0)
        z = bn(mm(h, P["w2"]))
        h2 = jnp.maximum(bn(mm(z, P["w3"]), P["g3"], P["b3"]), 0.0)
        p = mm(h2, P["w4"]) + P["b4"]
        return z, p

    q1, p1 = branch(x1)
    q2, p2 = branch(x2)

    def l2n(x, eps=1e-12):
        n = jnp.linalg.norm(x, axis=1, keepdims=True)
        return x / jnp.maximum(n, eps)

    carry = ((lambda t: t.astype(jnp.bfloat16).astype(jnp.float32))
             if mirror_kernel else (lambda t: t))

    p1n = carry(l2n(p1))
    q1n_f = l2n(q1)
    qs1 = carry(jax.nn.softmax(q1n_f / tau2, axis=1))
    q1n = carry(q1n_f)
    p2n = l2n(p2)
    q2n = l2n(q2)
    qs2 = jax.nn.softmax(q2n / tau2, axis=1)

    cos12 = jnp.mean(jnp.sum(p1n * q2n, axis=1))   # eps 1e-8 vs 1e-12: negligible
    cos21 = jnp.mean(jnp.sum(p2n * q1n, axis=1))
    loss_sim = -0.5 * (cos12 + cos21)
    mce12 = -jnp.mean(jnp.sum(qs2 * p1n, axis=1)) / tau1
    mce21 = -jnp.mean(jnp.sum(qs1 * p2n, axis=1)) / tau1
    loss_mce = 0.5 * (mce12 + mce21)
    qnorm = jnp.mean(jnp.linalg.norm(qs2, axis=1))
    return {"loss": scale * loss_mce + (1.0 - scale) * loss_sim,
            "sim": cos12, "qnorm": qnorm}


if __name__ == "__main__":
    # Small, lane-aligned synthetic shapes (module defaults are 2048/512/2048).
    B, CIN, HID, COUT = 16, 128, 128, 256
    key = jax.random.PRNGKey(0)
    kx1, kx2, kp = jax.random.split(key, 3)
    x1 = jax.random.normal(kx1, (B, CIN), jnp.float32)
    x2 = jax.random.normal(kx2, (B, CIN), jnp.float32)

    master = init_params(kp, CIN, HID, COUT)     # f32 training state
    params = prepare_params(master)              # ONE-TIME bf16 cast of weights

    def check(out, ref, atol, rtol, tag):
        for name in ("loss", "sim", "qnorm"):
            a, b = float(out[name]), float(ref[name])
            assert abs(a - b) <= atol + rtol * abs(b), (tag, name, a, b)

    # Default config: warmup_epoch=[0,0] -> scale=1.0 (pure MCE loss path).
    out = rcc_head_forward(x1, x2, params)
    out = jax.tree_util.tree_map(jax.block_until_ready, out)
    check(out, reference_forward(x1, x2, master, mirror_kernel=True),
          5e-3, 5e-3, "scale=1.0 vs bf16-mirrored reference")
    check(out, reference_forward(x1, x2, master, mirror_kernel=False),
          1e-1, 1e-1, "scale=1.0 vs full-f32 reference")

    # Mid-warmup config: scale=0.5 exercises both the MCE and the sim branches.
    out_w = rcc_head_forward(x1, x2, params, warmup_epoch=(0, 2), global_epoch=1)
    out_w = jax.tree_util.tree_map(jax.block_until_ready, out_w)
    check(out_w, reference_forward(x1, x2, master, scale=0.5, mirror_kernel=True),
          5e-3, 5e-3, "scale=0.5 vs bf16-mirrored reference")

    print("KERNEL_OK")
</pallas_src>

<mosaic_0001>
module attributes {stable_mosaic.version = 11 : i64} {
  func.func @rcc_fused_kernel(%arg0: memref<16x128xf32, #tpu.memory_space<vmem>>, %arg1: memref<16x128xf32, #tpu.memory_space<vmem>>, %arg2: memref<128x256xbf16, #tpu.memory_space<vmem>>, %arg3: memref<1x256xf32, #tpu.memory_space<vmem>>, %arg4: memref<1x256xf32, #tpu.memory_space<vmem>>, %arg5: memref<256x256xbf16, #tpu.memory_space<any>>, %arg6: memref<256x128xbf16, #tpu.memory_space<any>>, %arg7: memref<1x128xf32, #tpu.memory_space<vmem>>, %arg8: memref<1x128xf32, #tpu.memory_space<vmem>>, %arg9: memref<128x256xbf16, #tpu.memory_space<any>>, %arg10: memref<1x256xf32, #tpu.memory_space<vmem>>, %arg11: memref<1x1xf32, #tpu.memory_space<vmem>>, %arg12: memref<1x1xf32, #tpu.memory_space<vmem>>, %arg13: memref<1x1xf32, #tpu.memory_space<vmem>>, %arg14: memref<256x256xbf16, #tpu.memory_space<vmem>>, %arg15: memref<256x128xbf16, #tpu.memory_space<vmem>>, %arg16: memref<128x256xbf16, #tpu.memory_space<vmem>>, %arg17: memref<3x!tpu.dma_semaphore, #tpu.memory_space<semaphore_mem>>) attributes {dimension_semantics = [], scalar_prefetch = 0 : i64, scratch_operands = 4 : i64, tpu.core_type = #tpu.core_type<tc>} {
    %c0_i32 = arith.constant 0 : i32
    %0 = tpu.memref_slice %arg17[%c0_i32] : memref<3x!tpu.dma_semaphore, #tpu.memory_space<semaphore_mem>> -> memref<1x!tpu.dma_semaphore, #tpu.memory_space<semaphore_mem>>
    %1 = tpu.memref_squeeze %0 : memref<1x!tpu.dma_semaphore, #tpu.memory_space<semaphore_mem>> -> memref<!tpu.dma_semaphore, #tpu.memory_space<semaphore_mem>>
    tpu.enqueue_dma source(%arg5 : memref<256x256xbf16, #tpu.memory_space<any>>) target(%arg14 : memref<256x256xbf16, #tpu.memory_space<vmem>>) target_semaphore(%1 : memref<!tpu.dma_semaphore, #tpu.memory_space<semaphore_mem>>)
    %c1_i32 = arith.constant 1 : i32
    %2 = tpu.memref_slice %arg17[%c1_i32] : memref<3x!tpu.dma_semaphore, #tpu.memory_space<semaphore_mem>> -> memref<1x!tpu.dma_semaphore, #tpu.memory_space<semaphore_mem>>
    %3 = tpu.memref_squeeze %2 : memref<1x!tpu.dma_semaphore, #tpu.memory_space<semaphore_mem>> -> memref<!tpu.dma_semaphore, #tpu.memory_space<semaphore_mem>>
    tpu.enqueue_dma source(%arg6 : memref<256x128xbf16, #tpu.memory_space<any>>) target(%arg15 : memref<256x128xbf16, #tpu.memory_space<vmem>>) target_semaphore(%3 : memref<!tpu.dma_semaphore, #tpu.memory_space<semaphore_mem>>)
    %c2_i32 = arith.constant 2 : i32
    %4 = tpu.memref_slice %arg17[%c2_i32] : memref<3x!tpu.dma_semaphore, #tpu.memory_space<semaphore_mem>> -> memref<1x!tpu.dma_semaphore, #tpu.memory_space<semaphore_mem>>
    %5 = tpu.memref_squeeze %4 : memref<1x!tpu.dma_semaphore, #tpu.memory_space<semaphore_mem>> -> memref<!tpu.dma_semaphore, #tpu.memory_space<semaphore_mem>>
    tpu.enqueue_dma source(%arg9 : memref<128x256xbf16, #tpu.memory_space<any>>) target(%arg16 : memref<128x256xbf16, #tpu.memory_space<vmem>>) target_semaphore(%5 : memref<!tpu.dma_semaphore, #tpu.memory_space<semaphore_mem>>)
    %c0 = arith.constant 0 : index
    %c0_0 = arith.constant 0 : index
    %6 = vector.load %arg3[%c0, %c0_0] : memref<1x256xf32, #tpu.memory_space<vmem>>, vector<1x256xf32>
    %c0_1 = arith.constant 0 : index
    %c0_2 = arith.constant 0 : index
    %7 = vector.load %arg4[%c0_1, %c0_2] : memref<1x256xf32, #tpu.memory_space<vmem>>, vector<1x256xf32>
    %c0_3 = arith.constant 0 : index
    %c0_4 = arith.constant 0 : index
    %8 = vector.load %arg7[%c0_3, %c0_4] : memref<1x128xf32, #tpu.memory_space<vmem>>, vector<1x128xf32>
    %c0_5 = arith.constant 0 : index
    %c0_6 = arith.constant 0 : index
    %9 = vector.load %arg8[%c0_5, %c0_6] : memref<1x128xf32, #tpu.memory_space<vmem>>, vector<1x128xf32>
    %c0_7 = arith.constant 0 : index
    %c0_8 = arith.constant 0 : index
    %10 = vector.load %arg10[%c0_7, %c0_8] : memref<1x256xf32, #tpu.memory_space<vmem>>, vector<1x256xf32>
    %c0_9 = arith.constant 0 : index
    %c0_10 = arith.constant 0 : index
    %11 = vector.load %arg0[%c0_9, %c0_10] : memref<16x128xf32, #tpu.memory_space<vmem>>, vector<16x128xf32>
    %12 = arith.truncf %11 : vector<16x128xf32> to vector<16x128xbf16>
    %c0_11 = arith.constant 0 : index
    %c0_12 = arith.constant 0 : index
    %13 = vector.load %arg2[%c0_11, %c0_12] : memref<128x256xbf16, #tpu.memory_space<vmem>>, vector<128x256xbf16>
    %cst = arith.constant dense<0.000000e+00> : vector<16x256xf32>
    %14 = tpu.matmul %12, %13, %cst {dimension_numbers = #tpu.dot_dimension_numbers<[1], [0], [0], [1], [0, 0, 1, 1], [], []>} : vector<16x128xbf16>, vector<128x256xbf16>, vector<16x256xf32> -> vector<16x256xf32>
    %cst_13 = arith.constant dense<0.000000e+00> : vector<256xf32>
    %15 = vector.multi_reduction <add>, %14, %cst_13 [0] : vector<16x256xf32> to vector<256xf32>
    %16 = vector.shape_cast %15 : vector<256xf32> to vector<1x256xf32>
    %cst_14 = arith.constant 1.600000e+01 : f32
    %17 = vector.broadcast %cst_14 : f32 to vector<1x256xf32>
    %18 = arith.divf %16, %17 : vector<1x256xf32>
    %19 = arith.mulf %14, %14 : vector<16x256xf32>
    %cst_15 = arith.constant dense<0.000000e+00> : vector<256xf32>
    %20 = vector.multi_reduction <add>, %19, %cst_15 [0] : vector<16x256xf32> to vector<256xf32>
    %21 = vector.shape_cast %20 : vector<256xf32> to vector<1x256xf32>
    %cst_16 = arith.constant 1.600000e+01 : f32
    %22 = vector.broadcast %cst_16 : f32 to vector<1x256xf32>
    %23 = arith.divf %21, %22 : vector<1x256xf32>
    %24 = arith.mulf %18, %18 : vector<1x256xf32>
    %25 = arith.subf %23, %24 : vector<1x256xf32>
    %cst_17 = arith.constant 0.000000e+00 : f32
    %26 = vector.broadcast %cst_17 : f32 to vector<1x256xf32>
    %27 = arith.maximumf %25, %26 : vector<1x256xf32>
    %cst_18 = arith.constant 9.99999974E-6 : f32
    %28 = vector.broadcast %cst_18 : f32 to vector<1x256xf32>
    %29 = arith.addf %27, %28 : vector<1x256xf32>
    %30 = math.rsqrt %29 : vector<1x256xf32>
    %31 = arith.mulf %30, %6 : vector<1x256xf32>
    %32 = arith.mulf %18, %31 : vector<1x256xf32>
    %33 = arith.subf %7, %32 : vector<1x256xf32>
    %34 = vector.broadcast %31 : vector<1x256xf32> to vector<16x256xf32>
    %35 = arith.mulf %14, %34 : vector<16x256xf32>
    %36 = vector.broadcast %33 : vector<1x256xf32> to vector<16x256xf32>
    %37 = arith.addf %35, %36 : vector<16x256xf32>
    %cst_19 = arith.constant 0.000000e+00 : f32
    %38 = vector.broadcast %cst_19 : f32 to vector<16x256xf32>
    %39 = arith.maximumf %37, %38 : vector<16x256xf32>
    %c0_i32_20 = arith.constant 0 : i32
    %40 = tpu.memref_slice %arg17[%c0_i32_20] : memref<3x!tpu.dma_semaphore, #tpu.memory_space<semaphore_mem>> -> memref<1x!tpu.dma_semaphore, #tpu.memory_space<semaphore_mem>>
    %41 = tpu.memref_squeeze %40 : memref<1x!tpu.dma_semaphore, #tpu.memory_space<semaphore_mem>> -> memref<!tpu.dma_semaphore, #tpu.memory_space<semaphore_mem>>
    tpu.wait_dma2 semaphore(%41 : memref<!tpu.dma_semaphore, #tpu.memory_space<semaphore_mem>>) src(%arg5 : memref<256x256xbf16, #tpu.memory_space<any>>) dst(%arg14 : memref<256x256xbf16, #tpu.memory_space<vmem>>)
    %42 = arith.truncf %39 : vector<16x256xf32> to vector<16x256xbf16>
    %c0_21 = arith.constant 0 : index
    %c0_22 = arith.constant 0 : index
    %43 = vector.load %arg14[%c0_21, %c0_22] : memref<256x256xbf16, #tpu.memory_space<vmem>>, vector<256x256xbf16>
    %cst_23 = arith.constant dense<0.000000e+00> : vector<16x256xf32>
    %44 = tpu.matmul %42, %43, %cst_23 {dimension_numbers = #tpu.dot_dimension_numbers<[1], [0], [0], [1], [0, 0, 1, 1], [], []>} : vector<16x256xbf16>, vector<256x256xbf16>, vector<16x256xf32> -> vector<16x256xf32>
    %cst_24 = arith.constant dense<0.000000e+00> : vector<256xf32>
    %45 = vector.multi_reduction <add>, %44, %cst_24 [0] : vector<16x256xf32> to vector<256xf32>
    %46 = vector.shape_cast %45 : vector<256xf32> to vector<1x256xf32>
    %cst_25 = arith.constant 1.600000e+01 : f32
    %47 = vector.broadcast %cst_25 : f32 to vector<1x256xf32>
    %48 = arith.divf %46, %47 : vector<1x256xf32>
    %49 = arith.mulf %44, %44 : vector<16x256xf32>
    %cst_26 = arith.constant dense<0.000000e+00> : vector<256xf32>
    %50 = vector.multi_reduction <add>, %49, %cst_26 [0] : vector<16x256xf32> to vector<256xf32>
    %51 = vector.shape_cast %50 : vector<256xf32> to vector<1x256xf32>
    %cst_27 = arith.constant 1.600000e+01 : f32
    %52 = vector.broadcast %cst_27 : f32 to vector<1x256xf32>
    %53 = arith.divf %51, %52 : vector<1x256xf32>
    %54 = arith.mulf %48, %48 : vector<1x256xf32>
    %55 = arith.subf %53, %54 : vector<1x256xf32>
    %cst_28 = arith.constant 0.000000e+00 : f32
    %56 = vector.broadcast %cst_28 : f32 to vector<1x256xf32>
    %57 = arith.maximumf %55, %56 : vector<1x256xf32>
    %cst_29 = arith.constant 9.99999974E-6 : f32
    %58 = vector.broadcast %cst_29 : f32 to vector<1x256xf32>
    %59 = arith.addf %57, %58 : vector<1x256xf32>
    %60 = math.rsqrt %59 : vector<1x256xf32>
    %cst_30 = arith.constant 0.000000e+00 : f32
    %61 = vector.broadcast %cst_30 : f32 to vector<1x256xf32>
    %62 = arith.subf %61, %48 : vector<1x256xf32>
    %63 = arith.mulf %62, %60 : vector<1x256xf32>
    %64 = vector.broadcast %60 : vector<1x256xf32> to vector<16x256xf32>
    %65 = arith.mulf %44, %64 : vector<16x256xf32>
    %66 = vector.broadcast %63 : vector<1x256xf32> to vector<16x256xf32>
    %67 = arith.addf %65, %66 : vector<16x256xf32>
    %c1_i32_31 = arith.constant 1 : i32
    %68 = tpu.memref_slice %arg17[%c1_i32_31] : memref<3x!tpu.dma_semaphore, #tpu.memory_space<semaphore_mem>> -> memref<1x!tpu.dma_semaphore, #tpu.memory_space<semaphore_mem>>
    %69 = tpu.memref_squeeze %68 : memref<1x!tpu.dma_semaphore, #tpu.memory_space<semaphore_mem>> -> memref<!tpu.dma_semaphore, #tpu.memory_space<semaphore_mem>>
    tpu.wait_dma2 semaphore(%69 : memref<!tpu.dma_semaphore, #tpu.memory_space<semaphore_mem>>) src(%arg6 : memref<256x128xbf16, #tpu.memory_space<any>>) dst(%arg15 : memref<256x128xbf16, #tpu.memory_space<vmem>>)
    %70 = arith.truncf %67 : vector<16x256xf32> to vector<16x256xbf16>
    %c0_32 = arith.constant 0 : index
    %c0_33 = arith.constant 0 : index
    %71 = vector.load %arg15[%c0_32, %c0_33] : memref<256x128xbf16, #tpu.memory_space<vmem>>, vector<256x128xbf16>
    %cst_34 = arith.constant dense<0.000000e+00> : vector<16x128xf32>
    %72 = tpu.matmul %70, %71, %cst_34 {dimension_numbers = #tpu.dot_dimension_numbers<[1], [0], [0], [1], [0, 0, 1, 1], [], []>} : vector<16x256xbf16>, vector<256x128xbf16>, vector<16x128xf32> -> vector<16x128xf32>
    %cst_35 = arith.constant dense<0.000000e+00> : vector<128xf32>
    %73 = vector.multi_reduction <add>, %72, %cst_35 [0] : vector<16x128xf32> to vector<128xf32>
    %74 = vector.shape_cast %73 : vector<128xf32> to vector<1x128xf32>
    %cst_36 = arith.constant 1.600000e+01 : f32
    %75 = vector.broadcast %cst_36 : f32 to vector<1x128xf32>
    %76 = arith.divf %74, %75 : vector<1x128xf32>
    %77 = arith.mulf %72, %72 : vector<16x128xf32>
    %cst_37 = arith.constant dense<0.000000e+00> : vector<128xf32>
    %78 = vector.multi_reduction <add>, %77, %cst_37 [0] : vector<16x128xf32> to vector<128xf32>
    %79 = vector.shape_cast %78 : vector<128xf32> to vector<1x128xf32>
    %cst_38 = arith.constant 1.600000e+01 : f32
    %80 = vector.broadcast %cst_38 : f32 to vector<1x128xf32>
    %81 = arith.divf %79, %80 : vector<1x128xf32>
    %82 = arith.mulf %76, %76 : vector<1x128xf32>
    %83 = arith.subf %81, %82 : vector<1x128xf32>
    %cst_39 = arith.constant 0.000000e+00 : f32
    %84 = vector.broadcast %cst_39 : f32 to vector<1x128xf32>
    %85 = arith.maximumf %83, %84 : vector<1x128xf32>
    %cst_40 = arith.constant 9.99999974E-6 : f32
    %86 = vector.broadcast %cst_40 : f32 to vector<1x128xf32>
    %87 = arith.addf %85, %86 : vector<1x128xf32>
    %88 = math.rsqrt %87 : vector<1x128xf32>
    %89 = arith.mulf %88, %8 : vector<1x128xf32>
    %90 = arith.mulf %76, %89 : vector<1x128xf32>
    %91 = arith.subf %9, %90 : vector<1x128xf32>
    %92 = vector.broadcast %89 : vector<1x128xf32> to vector<16x128xf32>
    %93 = arith.mulf %72, %92 : vector<16x128xf32>
    %94 = vector.broadcast %91 : vector<1x128xf32> to vector<16x128xf32>
    %95 = arith.addf %93, %94 : vector<16x128xf32>
    %cst_41 = arith.constant 0.000000e+00 : f32
    %96 = vector.broadcast %cst_41 : f32 to vector<16x128xf32>
    %97 = arith.maximumf %95, %96 : vector<16x128xf32>
    %c2_i32_42 = arith.constant 2 : i32
    %98 = tpu.memref_slice %arg17[%c2_i32_42] : memref<3x!tpu.dma_semaphore, #tpu.memory_space<semaphore_mem>> -> memref<1x!tpu.dma_semaphore, #tpu.memory_space<semaphore_mem>>
    %99 = tpu.memref_squeeze %98 : memref<1x!tpu.dma_semaphore, #tpu.memory_space<semaphore_mem>> -> memref<!tpu.dma_semaphore, #tpu.memory_space<semaphore_mem>>
    tpu.wait_dma2 semaphore(%99 : memref<!tpu.dma_semaphore, #tpu.memory_space<semaphore_mem>>) src(%arg9 : memref<128x256xbf16, #tpu.memory_space<any>>) dst(%arg16 : memref<128x256xbf16, #tpu.memory_space<vmem>>)
    %100 = arith.truncf %97 : vector<16x128xf32> to vector<16x128xbf16>
    %c0_43 = arith.constant 0 : index
    %c0_44 = arith.constant 0 : index
    %101 = vector.load %arg16[%c0_43, %c0_44] : memref<128x256xbf16, #tpu.memory_space<vmem>>, vector<128x256xbf16>
    %cst_45 = arith.constant dense<0.000000e+00> : vector<16x256xf32>
    %102 = tpu.matmul %100, %101, %cst_45 {dimension_numbers = #tpu.dot_dimension_numbers<[1], [0], [0], [1], [0, 0, 1, 1], [], []>} : vector<16x128xbf16>, vector<128x256xbf16>, vector<16x256xf32> -> vector<16x256xf32>
    %103 = vector.broadcast %10 : vector<1x256xf32> to vector<16x256xf32>
    %104 = arith.addf %102, %103 : vector<16x256xf32>
    %105 = arith.mulf %104, %104 : vector<16x256xf32>
    %cst_46 = arith.constant dense<0.000000e+00> : vector<16xf32>
    %106 = vector.multi_reduction <add>, %105, %cst_46 [1] : vector<16x256xf32> to vector<16xf32>
    %107 = vector.shape_cast %106 : vector<16xf32> to vector<16x1xf32>
    %cst_47 = arith.constant 1.000000e-24 : f32
    %108 = vector.broadcast %cst_47 : f32 to vector<16x1xf32>
    %109 = arith.maximumf %107, %108 : vector<16x1xf32>
    %110 = math.rsqrt %109 : vector<16x1xf32>
    %111 = vector.broadcast %110 : vector<16x1xf32> to vector<16x256xf32>
    %112 = arith.mulf %104, %111 : vector<16x256xf32>
    %113 = arith.truncf %112 : vector<16x256xf32> to vector<16x256xbf16>
    %114 = arith.mulf %67, %67 : vector<16x256xf32>
    %cst_48 = arith.constant dense<0.000000e+00> : vector<16xf32>
    %115 = vector.multi_reduction <add>, %114, %cst_48 [1] : vector<16x256xf32> to vector<16xf32>
    %116 = vector.shape_cast %115 : vector<16xf32> to vector<16x1xf32>
    %cst_49 = arith.constant 1.000000e-24 : f32
    %117 = vector.broadcast %cst_49 : f32 to vector<16x1xf32>
    %118 = arith.maximumf %116, %117 : vector<16x1xf32>
    %119 = math.rsqrt %118 : vector<16x1xf32>
    %120 = vector.broadcast %119 : vector<16x1xf32> to vector<16x256xf32>
    %121 = arith.mulf %67, %120 : vector<16x256xf32>
    %cst_50 = arith.constant 2.000000e+01 : f32
    %122 = vector.broadcast %cst_50 : f32 to vector<16x256xf32>
    %123 = arith.mulf %121, %122 : vector<16x256xf32>
    %124 = math.exp %123 : vector<16x256xf32>
    %cst_51 = arith.constant dense<0.000000e+00> : vector<16xf32>
    %125 = vector.multi_reduction <add>, %124, %cst_51 [1] : vector<16x256xf32> to vector<16xf32>
    %126 = vector.shape_cast %125 : vector<16xf32> to vector<16x1xf32>
    %cst_52 = arith.constant 1.000000e+00 : f32
    %127 = vector.broadcast %cst_52 : f32 to vector<16x1xf32>
    %128 = arith.divf %127, %126 : vector<16x1xf32>
    %129 = vector.broadcast %128 : vector<16x1xf32> to vector<16x256xf32>
    %130 = arith.mulf %124, %129 : vector<16x256xf32>
    %131 = arith.truncf %130 : vector<16x256xf32> to vector<16x256xbf16>
    %c0_53 = arith.constant 0 : index
    %c0_54 = arith.constant 0 : index
    %132 = vector.load %arg1[%c0_53, %c0_54] : memref<16x128xf32, #tpu.memory_space<vmem>>, vector<16x128xf32>
    %133 = arith.truncf %132 : vector<16x128xf32> to vector<16x128xbf16>
    %c0_55 = arith.constant 0 : index
    %c0_56 = arith.constant 0 : index
    %134 = vector.load %arg2[%c0_55, %c0_56] : memref<128x256xbf16, #tpu.memory_space<vmem>>, vector<128x256xbf16>
    %cst_57 = arith.constant dense<0.000000e+00> : vector<16x256xf32>
    %135 = tpu.matmul %133, %134, %cst_57 {dimension_numbers = #tpu.dot_dimension_numbers<[1], [0], [0], [1], [0, 0, 1, 1], [], []>} : vector<16x128xbf16>, vector<128x256xbf16>, vector<16x256xf32> -> vector<16x256xf32>
    %cst_58 = arith.constant dense<0.000000e+00> : vector<256xf32>
    %136 = vector.multi_reduction <add>, %135, %cst_58 [0] : vector<16x256xf32> to vector<256xf32>
    %137 = vector.shape_cast %136 : vector<256xf32> to vector<1x256xf32>
    %cst_59 = arith.constant 1.600000e+01 : f32
    %138 = vector.broadcast %cst_59 : f32 to vector<1x256xf32>
    %139 = arith.divf %137, %138 : vector<1x256xf32>
    %140 = arith.mulf %135, %135 : vector<16x256xf32>
    %cst_60 = arith.constant dense<0.000000e+00> : vector<256xf32>
    %141 = vector.multi_reduction <add>, %140, %cst_60 [0] : vector<16x256xf32> to vector<256xf32>
    %142 = vector.shape_cast %141 : vector<256xf32> to vector<1x256xf32>
    %cst_61 = arith.constant 1.600000e+01 : f32
    %143 = vector.broadcast %cst_61 : f32 to vector<1x256xf32>
    %144 = arith.divf %142, %143 : vector<1x256xf32>
    %145 = arith.mulf %139, %139 : vector<1x256xf32>
    %146 = arith.subf %144, %145 : vector<1x256xf32>
    %cst_62 = arith.constant 0.000000e+00 : f32
    %147 = vector.broadcast %cst_62 : f32 to vector<1x256xf32>
    %148 = arith.maximumf %146, %147 : vector<1x256xf32>
    %cst_63 = arith.constant 9.99999974E-6 : f32
    %149 = vector.broadcast %cst_63 : f32 to vector<1x256xf32>
    %150 = arith.addf %148, %149 : vector<1x256xf32>
    %151 = math.rsqrt %150 : vector<1x256xf32>
    %152 = arith.mulf %151, %6 : vector<1x256xf32>
    %153 = arith.mulf %139, %152 : vector<1x256xf32>
    %154 = arith.subf %7, %153 : vector<1x256xf32>
    %155 = vector.broadcast %152 : vector<1x256xf32> to vector<16x256xf32>
    %156 = arith.mulf %135, %155 : vector<16x256xf32>
    %157 = vector.broadcast %154 : vector<1x256xf32> to vector<16x256xf32>
    %158 = arith.addf %156, %157 : vector<16x256xf32>
    %cst_64 = arith.constant 0.000000e+00 : f32
    %159 = vector.broadcast %cst_64 : f32 to vector<16x256xf32>
    %160 = arith.maximumf %158, %159 : vector<16x256xf32>
    %161 = arith.truncf %160 : vector<16x256xf32> to vector<16x256xbf16>
    %c0_65 = arith.constant 0 : index
    %c0_66 = arith.constant 0 : index
    %162 = vector.load %arg14[%c0_65, %c0_66] : memref<256x256xbf16, #tpu.memory_space<vmem>>, vector<256x256xbf16>
    %cst_67 = arith.constant dense<0.000000e+00> : vector<16x256xf32>
    %163 = tpu.matmul %161, %162, %cst_67 {dimension_numbers = #tpu.dot_dimension_numbers<[1], [0], [0], [1], [0, 0, 1, 1], [], []>} : vector<16x256xbf16>, vector<256x256xbf16>, vector<16x256xf32> -> vector<16x256xf32>
    %cst_68 = arith.constant dense<0.000000e+00> : vector<256xf32>
    %164 = vector.multi_reduction <add>, %163, %cst_68 [0] : vector<16x256xf32> to vector<256xf32>
    %165 = vector.shape_cast %164 : vector<256xf32> to vector<1x256xf32>
    %cst_69 = arith.constant 1.600000e+01 : f32
    %166 = vector.broadcast %cst_69 : f32 to vector<1x256xf32>
    %167 = arith.divf %165, %166 : vector<1x256xf32>
    %168 = arith.mulf %163, %163 : vector<16x256xf32>
    %cst_70 = arith.constant dense<0.000000e+00> : vector<256xf32>
    %169 = vector.multi_reduction <add>, %168, %cst_70 [0] : vector<16x256xf32> to vector<256xf32>
    %170 = vector.shape_cast %169 : vector<256xf32> to vector<1x256xf32>
    %cst_71 = arith.constant 1.600000e+01 : f32
    %171 = vector.broadcast %cst_71 : f32 to vector<1x256xf32>
    %172 = arith.divf %170, %171 : vector<1x256xf32>
    %173 = arith.mulf %167, %167 : vector<1x256xf32>
    %174 = arith.subf %172, %173 : vector<1x256xf32>
    %cst_72 = arith.constant 0.000000e+00 : f32
    %175 = vector.broadcast %cst_72 : f32 to vector<1x256xf32>
    %176 = arith.maximumf %174, %175 : vector<1x256xf32>
    %cst_73 = arith.constant 9.99999974E-6 : f32
    %177 = vector.broadcast %cst_73 : f32 to vector<1x256xf32>
    %178 = arith.addf %176, %177 : vector<1x256xf32>
    %179 = math.rsqrt %178 : vector<1x256xf32>
    %cst_74 = arith.constant 0.000000e+00 : f32
    %180 = vector.broadcast %cst_74 : f32 to vector<1x256xf32>
    %181 = arith.subf %180, %167 : vector<1x256xf32>
    %182 = arith.mulf %181, %179 : vector<1x256xf32>
    %183 = vector.broadcast %179 : vector<1x256xf32> to vector<16x256xf32>
    %184 = arith.mulf %163, %183 : vector<16x256xf32>
    %185 = vector.broadcast %182 : vector<1x256xf32> to vector<16x256xf32>
    %186 = arith.addf %184, %185 : vector<16x256xf32>
    %187 = arith.truncf %186 : vector<16x256xf32> to vector<16x256xbf16>
    %c0_75 = arith.constant 0 : index
    %c0_76 = arith.constant 0 : index
    %188 = vector.load %arg15[%c0_75, %c0_76] : memref<256x128xbf16, #tpu.memory_space<vmem>>, vector<256x128xbf16>
    %cst_77 = arith.constant dense<0.000000e+00> : vector<16x128xf32>
    %189 = tpu.matmul %187, %188, %cst_77 {dimension_numbers = #tpu.dot_dimension_numbers<[1], [0], [0], [1], [0, 0, 1, 1], [], []>} : vector<16x256xbf16>, vector<256x128xbf16>, vector<16x128xf32> -> vector<16x128xf32>
    %cst_78 = arith.constant dense<0.000000e+00> : vector<128xf32>
    %190 = vector.multi_reduction <add>, %189, %cst_78 [0] : vector<16x128xf32> to vector<128xf32>
    %191 = vector.shape_cast %190 : vector<128xf32> to vector<1x128xf32>
    %cst_79 = arith.constant 1.600000e+01 : f32
    %192 = vector.broadcast %cst_79 : f32 to vector<1x128xf32>
    %193 = arith.divf %191, %192 : vector<1x128xf32>
    %194 = arith.mulf %189, %189 : vector<16x128xf32>
    %cst_80 = arith.constant dense<0.000000e+00> : vector<128xf32>
    %195 = vector.multi_reduction <add>, %194, %cst_80 [0] : vector<16x128xf32> to vector<128xf32>
    %196 = vector.shape_cast %195 : vector<128xf32> to vector<1x128xf32>
    %cst_81 = arith.constant 1.600000e+01 : f32
    %197 = vector.broadcast %cst_81 : f32 to vector<1x128xf32>
    %198 = arith.divf %196, %197 : vector<1x128xf32>
    %199 = arith.mulf %193, %193 : vector<1x128xf32>
    %200 = arith.subf %198, %199 : vector<1x128xf32>
    %cst_82 = arith.constant 0.000000e+00 : f32
    %201 = vector.broadcast %cst_82 : f32 to vector<1x128xf32>
    %202 = arith.maximumf %200, %201 : vector<1x128xf32>
    %cst_83 = arith.constant 9.99999974E-6 : f32
    %203 = vector.broadcast %cst_83 : f32 to vector<1x128xf32>
    %204 = arith.addf %202, %203 : vector<1x128xf32>
    %205 = math.rsqrt %204 : vector<1x128xf32>
    %206 = arith.mulf %205, %8 : vector<1x128xf32>
    %207 = arith.mulf %193, %206 : vector<1x128xf32>
    %208 = arith.subf %9, %207 : vector<1x128xf32>
    %209 = vector.broadcast %206 : vector<1x128xf32> to vector<16x128xf32>
    %210 = arith.mulf %189, %209 : vector<16x128xf32>
    %211 = vector.broadcast %208 : vector<1x128xf32> to vector<16x128xf32>
    %212 = arith.addf %210, %211 : vector<16x128xf32>
    %cst_84 = arith.constant 0.000000e+00 : f32
    %213 = vector.broadcast %cst_84 : f32 to vector<16x128xf32>
    %214 = arith.maximumf %212, %213 : vector<16x128xf32>
    %215 = arith.truncf %214 : vector<16x128xf32> to vector<16x128xbf16>
    %c0_85 = arith.constant 0 : index
    %c0_86 = arith.constant 0 : index
    %216 = vector.load %arg16[%c0_85, %c0_86] : memref<128x256xbf16, #tpu.memory_space<vmem>>, vector<128x256xbf16>
    %cst_87 = arith.constant dense<0.000000e+00> : vector<16x256xf32>
    %217 = tpu.matmul %215, %216, %cst_87 {dimension_numbers = #tpu.dot_dimension_numbers<[1], [0], [0], [1], [0, 0, 1, 1], [], []>} : vector<16x128xbf16>, vector<128x256xbf16>, vector<16x256xf32> -> vector<16x256xf32>
    %218 = vector.broadcast %10 : vector<1x256xf32> to vector<16x256xf32>
    %219 = arith.addf %217, %218 : vector<16x256xf32>
    %220 = arith.mulf %186, %186 : vector<16x256xf32>
    %cst_88 = arith.constant dense<0.000000e+00> : vector<16xf32>
    %221 = vector.multi_reduction <add>, %220, %cst_88 [1] : vector<16x256xf32> to vector<16xf32>
    %222 = vector.shape_cast %221 : vector<16xf32> to vector<16x1xf32>
    %cst_89 = arith.constant 1.000000e-24 : f32
    %223 = vector.broadcast %cst_89 : f32 to vector<16x1xf32>
    %224 = arith.maximumf %222, %223 : vector<16x1xf32>
    %225 = math.rsqrt %224 : vector<16x1xf32>
    %226 = vector.broadcast %225 : vector<16x1xf32> to vector<16x256xf32>
    %227 = arith.mulf %186, %226 : vector<16x256xf32>
    %228 = arith.mulf %219, %219 : vector<16x256xf32>
    %cst_90 = arith.constant dense<0.000000e+00> : vector<16xf32>
    %229 = vector.multi_reduction <add>, %228, %cst_90 [1] : vector<16x256xf32> to vector<16xf32>
    %230 = vector.shape_cast %229 : vector<16xf32> to vector<16x1xf32>
    %cst_91 = arith.constant 1.000000e-24 : f32
    %231 = vector.broadcast %cst_91 : f32 to vector<16x1xf32>
    %232 = arith.maximumf %230, %231 : vector<16x1xf32>
    %233 = math.rsqrt %232 : vector<16x1xf32>
    %234 = vector.broadcast %233 : vector<16x1xf32> to vector<16x256xf32>
    %235 = arith.mulf %219, %234 : vector<16x256xf32>
    %cst_92 = arith.constant 2.000000e+01 : f32
    %236 = vector.broadcast %cst_92 : f32 to vector<16x256xf32>
    %237 = arith.mulf %227, %236 : vector<16x256xf32>
    %238 = math.exp %237 : vector<16x256xf32>
    %cst_93 = arith.constant dense<0.000000e+00> : vector<16xf32>
    %239 = vector.multi_reduction <add>, %238, %cst_93 [1] : vector<16x256xf32> to vector<16xf32>
    %240 = vector.shape_cast %239 : vector<16xf32> to vector<16x1xf32>
    %cst_94 = arith.constant 1.000000e+00 : f32
    %241 = vector.broadcast %cst_94 : f32 to vector<16x1xf32>
    %242 = arith.divf %241, %240 : vector<16x1xf32>
    %243 = vector.broadcast %242 : vector<16x1xf32> to vector<16x256xf32>
    %244 = arith.mulf %238, %243 : vector<16x256xf32>
    %245 = arith.extf %113 : vector<16x256xbf16> to vector<16x256xf32>
    %246 = arith.mulf %245, %227 : vector<16x256xf32>
    %cst_95 = arith.constant dense<0.000000e+00> : vector<16xf32>
    %247 = vector.multi_reduction <add>, %246, %cst_95 [1] : vector<16x256xf32> to vector<16xf32>
    %248 = vector.shape_cast %247 : vector<16xf32> to vector<16x1xf32>
    %cst_96 = arith.constant dense<0.000000e+00> : vector<1xf32>
    %249 = vector.multi_reduction <add>, %248, %cst_96 [0] : vector<16x1xf32> to vector<1xf32>
    %250 = vector.shape_cast %249 : vector<1xf32> to vector<1x1xf32>
    %cst_97 = arith.constant 1.600000e+01 : f32
    %251 = vector.broadcast %cst_97 : f32 to vector<1x1xf32>
    %252 = arith.divf %250, %251 : vector<1x1xf32>
    %253 = arith.mulf %244, %244 : vector<16x256xf32>
    %cst_98 = arith.constant dense<0.000000e+00> : vector<16xf32>
    %254 = vector.multi_reduction <add>, %253, %cst_98 [1] : vector<16x256xf32> to vector<16xf32>
    %255 = vector.shape_cast %254 : vector<16xf32> to vector<16x1xf32>
    %256 = math.sqrt %255 : vector<16x1xf32>
    %cst_99 = arith.constant dense<0.000000e+00> : vector<1xf32>
    %257 = vector.multi_reduction <add>, %256, %cst_99 [0] : vector<16x1xf32> to vector<1xf32>
    %258 = vector.shape_cast %257 : vector<1xf32> to vector<1x1xf32>
    %cst_100 = arith.constant 1.600000e+01 : f32
    %259 = vector.broadcast %cst_100 : f32 to vector<1x1xf32>
    %260 = arith.divf %258, %259 : vector<1x1xf32>
    %cst_101 = arith.constant 0.000000e+00 : f32
    %261 = vector.broadcast %cst_101 : f32 to vector<1x1xf32>
    %262 = arith.extf %113 : vector<16x256xbf16> to vector<16x256xf32>
    %263 = arith.mulf %244, %262 : vector<16x256xf32>
    %cst_102 = arith.constant dense<0.000000e+00> : vector<16xf32>
    %264 = vector.multi_reduction <add>, %263, %cst_102 [1] : vector<16x256xf32> to vector<16xf32>
    %265 = vector.shape_cast %264 : vector<16xf32> to vector<16x1xf32>
    %cst_103 = arith.constant dense<0.000000e+00> : vector<1xf32>
    %266 = vector.multi_reduction <add>, %265, %cst_103 [0] : vector<16x1xf32> to vector<1xf32>
    %267 = vector.shape_cast %266 : vector<1xf32> to vector<1x1xf32>
    %cst_104 = arith.constant 1.600000e+01 : f32
    %268 = vector.broadcast %cst_104 : f32 to vector<1x1xf32>
    %269 = arith.divf %267, %268 : vector<1x1xf32>
    %cst_105 = arith.constant 0.000000e+00 : f32
    %270 = vector.broadcast %cst_105 : f32 to vector<1x1xf32>
    %271 = arith.subf %270, %269 : vector<1x1xf32>
    %cst_106 = arith.constant 1.000000e+01 : f32
    %272 = vector.broadcast %cst_106 : f32 to vector<1x1xf32>
    %273 = arith.mulf %271, %272 : vector<1x1xf32>
    %274 = arith.extf %131 : vector<16x256xbf16> to vector<16x256xf32>
    %275 = arith.mulf %274, %235 : vector<16x256xf32>
    %cst_107 = arith.constant dense<0.000000e+00> : vector<16xf32>
    %276 = vector.multi_reduction <add>, %275, %cst_107 [1] : vector<16x256xf32> to vector<16xf32>
    %277 = vector.shape_cast %276 : vector<16xf32> to vector<16x1xf32>
    %cst_108 = arith.constant dense<0.000000e+00> : vector<1xf32>
    %278 = vector.multi_reduction <add>, %277, %cst_108 [0] : vector<16x1xf32> to vector<1xf32>
    %279 = vector.shape_cast %278 : vector<1xf32> to vector<1x1xf32>
    %cst_109 = arith.constant 1.600000e+01 : f32
    %280 = vector.broadcast %cst_109 : f32 to vector<1x1xf32>
    %281 = arith.divf %279, %280 : vector<1x1xf32>
    %cst_110 = arith.constant 0.000000e+00 : f32
    %282 = vector.broadcast %cst_110 : f32 to vector<1x1xf32>
    %283 = arith.subf %282, %281 : vector<1x1xf32>
    %cst_111 = arith.constant 1.000000e+01 : f32
    %284 = vector.broadcast %cst_111 : f32 to vector<1x1xf32>
    %285 = arith.mulf %283, %284 : vector<1x1xf32>
    %286 = arith.addf %273, %285 : vector<1x1xf32>
    %cst_112 = arith.constant 5.000000e-01 : f32
    %287 = vector.broadcast %cst_112 : f32 to vector<1x1xf32>
    %288 = arith.mulf %287, %286 : vector<1x1xf32>
    %289 = arith.addf %261, %288 : vector<1x1xf32>
    %c0_113 = arith.constant 0 : index
    %c0_114 = arith.constant 0 : index
    %290 = vector.load %arg11[%c0_113, %c0_114] : memref<1x1xf32, #tpu.memory_space<vmem>>, vector<1x1xf32>
    tpu.vector_store %arg11[%c0_113, %c0_114], %289 {strides = array<i32>} : memref<1x1xf32, #tpu.memory_space<vmem>>, vector<1x1xf32>,
    %c0_115 = arith.constant 0 : index
    %c0_116 = arith.constant 0 : index
    %291 = vector.load %arg12[%c0_115, %c0_116] : memref<1x1xf32, #tpu.memory_space<vmem>>, vector<1x1xf32>
    tpu.vector_store %arg12[%c0_115, %c0_116], %252 {strides = array<i32>} : memref<1x1xf32, #tpu.memory_space<vmem>>, vector<1x1xf32>,
    %c0_117 = arith.constant 0 : index
    %c0_118 = arith.constant 0 : index
    %292 = vector.load %arg13[%c0_117, %c0_118] : memref<1x1xf32, #tpu.memory_space<vmem>>, vector<1x1xf32>
    tpu.vector_store %arg13[%c0_117, %c0_118], %260 {strides = array<i32>} : memref<1x1xf32, #tpu.memory_space<vmem>>, vector<1x1xf32>,
    return
  }
}

</mosaic_0001>

<llo_original>
// kernel: tpu_custom_call.1
$region0: #{tpu_custom_call.1}
  #allocation0 [shape = 'u32[]', space=smem, size = 0x4, offset = 0x4, fixed_abs, tag = 'smem constant byte address 0x4 - core index']
  #allocation1 [shape = 'u32[144,128]{1,0:T(1,128)}', space=vmem, size = 0x12000, scoped, tag = 'internal scratch']
  #allocation2 [shape = 'bf16[256,256]{1,0:T(8,128)(2,1)}', space=vmem, size = 0x20000, scoped, tag = 'scratch operand']
  #allocation3 [shape = 'bf16[256,128]{1,0:T(8,128)(2,1)}', space=vmem, size = 0x10000, scoped, tag = 'scratch operand']
  #allocation4 [shape = 'bf16[128,256]{1,0:T(8,128)(2,1)}', space=vmem, size = 0x10000, scoped, tag = 'scratch operand']
  #allocation5 [shape = 's32[3]{0}', space=sflag, size = 0xc, scoped, tag = 'scratch operand']
  #allocation16 [shape = 's32[]', space=sflag, size = 0x4, offset = 0, fixed_abs, tag = 'sflag constant byte address 0x0 - dummy sync flag']
  #allocation17 [shape = 's32[]', space=sflag, size = 0x4, offset = 0, fixed_abs, tag = 'sflag constant byte address 0x0 - dummy sync flag']
  #allocation18 [shape = 'u32[]', space=smem, size = 0x4, offset = 0x44, fixed_abs, tag = 'smem constant byte address 0x44 - assertion arg 0']
  #allocation19 [shape = 'u32[]', space=smem, size = 0x4, offset = 0x48, fixed_abs, tag = 'smem constant byte address 0x48 - assertion arg 1']
  #allocation20 [shape = 's32[]', space=sflag, size = 0x4, offset = 0, fixed_abs, tag = 'sflag constant byte address 0x0 - dummy sync flag']
  #allocation21 [shape = 's32[]', space=sflag, size = 0x4, offset = 0, fixed_abs, tag = 'sflag constant byte address 0x0 - dummy sync flag']
  #allocation22 [shape = 's32[]', space=sflag, size = 0x4, offset = 0, fixed_abs, tag = 'sflag constant byte address 0x0 - dummy sync flag']
  #allocation23 [shape = 's32[]', space=sflag, size = 0x4, offset = 0, fixed_abs, tag = 'sflag constant byte address 0x0 - dummy sync flag']
  %s0 = inlined_call_operand.hbm [shape: f32[16,128], index: 0, kind: input, shape index: {}]
  %s1 = inlined_call_operand.hbm [shape: f32[16,128], index: 1, kind: input, shape index: {}]
  %s2 = inlined_call_operand.hbm [shape: bf16[128,256], index: 2, kind: input, shape index: {}]
  %s3 = inlined_call_operand.vmem [shape: f32[1,256], index: 3, kind: input, shape index: {}]
  %s4 = inlined_call_operand.vmem [shape: f32[1,256], index: 4, kind: input, shape index: {}]
  %s5 = inlined_call_operand.hbm [shape: bf16[256,256], index: 5, kind: input, shape index: {}]
  %s6 = inlined_call_operand.hbm [shape: bf16[256,128], index: 6, kind: input, shape index: {}]
  %s7 = inlined_call_operand.vmem [shape: f32[1,128], index: 7, kind: input, shape index: {}]
  %s8 = inlined_call_operand.vmem [shape: f32[1,128], index: 8, kind: input, shape index: {}]
  %s9 = inlined_call_operand.hbm [shape: bf16[128,256], index: 9, kind: input, shape index: {}]
  %s10 = inlined_call_operand.vmem [shape: f32[1,256], index: 10, kind: input, shape index: {}]
  %s11 = inlined_call_operand.hbm [shape: f32[1,1], index: 11, kind: output, shape index: {0}]
  %s12 = inlined_call_operand.hbm [shape: f32[1,1], index: 12, kind: output, shape index: {1}]
  %s13 = inlined_call_operand.hbm [shape: f32[1,1], index: 13, kind: output, shape index: {2}]
  %14 = xla_tuple %s11, %s12, %s13
  %s15 = sld [smem:[#allocation0]]
  $region82: #{tpu_custom_call.1} parent=0
    _
  %s17 = ssub.s32 1, %s15
  %s18 = scalar_select 0, %s17, %s15
  $region1: #{tpu_custom_call.1} parent=0
    #allocation6 [shape = 'u8[8192]{0}', space=vmem, size = 0x2000, scoped, tag = 'input window, operand 0, single buffered']
    #allocation7 [shape = 's32[1]{0}', space=sflag, size = 0x4, scoped, tag = 'scoped memory for tpu_custom_call.1']
    #allocation8 [shape = 's32[1]{0}', space=sflag, size = 0x4, scoped, tag = 'scoped memory for tpu_custom_call.1']
    #allocation9 [shape = 'u8[8192]{0}', space=vmem, size = 0x2000, scoped, tag = 'input window, operand 1, single buffered']
    #allocation10 [shape = 's32[1]{0}', space=sflag, size = 0x4, scoped, tag = 'scoped memory for tpu_custom_call.1']
    #allocation11 [shape = 'u8[65536]{0}', space=vmem, size = 0x10000, scoped, tag = 'input window, operand 2, single buffered']
    #allocation12 [shape = 'u8[512]{0}', space=vmem, size = 0x400, scoped, tag = 'output window, operand 0, single buffered']
    #allocation13 [shape = 'u8[512]{0}', space=vmem, size = 0x400, scoped, tag = 'output window, operand 1, single buffered']
    #allocation14 [shape = 's32[1]{0}', space=sflag, size = 0x4, scoped, tag = 'scoped memory for tpu_custom_call.1']
    #allocation15 [shape = 'u8[512]{0}', space=vmem, size = 0x400, scoped, tag = 'output window, operand 2, single buffered']
    %19 = vsyncpa [#allocation7], 0
    %20 = vsyncpa [#allocation10], 0
    %21 = vsyncpa [#allocation8], 0
    %22 = vsyncpa [#allocation14], 0
    // Predicated region
    $region2: #{tpu_custom_call.1} parent=1 // pred_check
      _
    $region3: #{tpu_custom_call.1} parent=1 // pred_check_branch
      %24 = sbr.rel (0) target = $region5
    $region4: #{tpu_custom_call.1} parent=1 // pred_region
      %s26 = ssub.s32 256, 256
      %27 = vsyncadd [#allocation7], %s26
      %s28 = sshll.u32 [#allocation6], 4
      %s29 = int_to_ptr.vmem [resolvable:$true] %s28
      %34 = dma.hbm_to_vmem [thread:$0]  %s0, 256, %s29, [#allocation7], 128, 128, 8
    $region5: #{tpu_custom_call.1} parent=1 // pred_fallthru
      _
    // Predicated region
    $region6: #{tpu_custom_call.1} parent=1 // pred_check
      _
    $region7: #{tpu_custom_call.1} parent=1 // pred_check_branch
      %36 = sbr.rel (0) target = $region9
    $region8: #{tpu_custom_call.1} parent=1 // pred_region
      %s38 = ssub.s32 256, 256
      %39 = vsyncadd [#allocation10], %s38
      %s40 = sshll.u32 [#allocation9], 4
      %s41 = int_to_ptr.vmem [resolvable:$true] %s40
      %46 = dma.hbm_to_vmem [thread:$0]  %s1, 256, %s41, [#allocation10], 128, 128, 8
    $region9: #{tpu_custom_call.1} parent=1 // pred_fallthru
      _
    // Predicated region
    $region10: #{tpu_custom_call.1} parent=1 // pred_check
      _
    $region11: #{tpu_custom_call.1} parent=1 // pred_check_branch
      %48 = sbr.rel (0) target = $region13
    $region12: #{tpu_custom_call.1} parent=1 // pred_region
      %s50 = ssub.s32 2048, 2048
      %51 = vsyncadd [#allocation10], %s50
      %s52 = sshll.u32 [#allocation11], 4
      %s53 = int_to_ptr.vmem [resolvable:$true] %s52
      %58 = dma.hbm_to_vmem [thread:$0]  %s2, 2048, %s53, [#allocation10], 128, 128, 8
    $region13: #{tpu_custom_call.1} parent=1 // pred_fallthru
      _
    // Predicated region
    $region14: #{tpu_custom_call.1} parent=1 // pred_check
      _
    $region15: #{tpu_custom_call.1} parent=1 // pred_check_branch
      %60 = sbr.rel (0) target = $region17
    $region16: #{tpu_custom_call.1} parent=1 // pred_region
      _
    $region17: #{tpu_custom_call.1} parent=1 // pred_fallthru
      _
    // Predicated region
    $region18: #{tpu_custom_call.1} parent=1 // pred_check
      _
    $region19: #{tpu_custom_call.1} parent=1 // pred_check_branch
      %62 = sbr.rel (0) target = $region21
    $region20: #{tpu_custom_call.1} parent=1 // pred_region
      _
    $region21: #{tpu_custom_call.1} parent=1 // pred_fallthru
      _
    // Predicated region
    $region22: #{tpu_custom_call.1} parent=1 // pred_check
      _
    $region23: #{tpu_custom_call.1} parent=1 // pred_check_branch
      %64 = sbr.rel (0) target = $region25
    $region24: #{tpu_custom_call.1} parent=1 // pred_region
      _
    $region25: #{tpu_custom_call.1} parent=1 // pred_fallthru
      _
    // Predicated region
    $region26: #{tpu_custom_call.1} parent=1 // pred_check
      _
    $region27: #{tpu_custom_call.1} parent=1 // pred_check_branch
      %66 = sbr.rel (0) target = $region29
    $region28: #{tpu_custom_call.1} parent=1 // pred_region
      _
    $region29: #{tpu_custom_call.1} parent=1 // pred_fallthru
      _
    // Predicated region
    $region30: #{tpu_custom_call.1} parent=1 // pred_check
      _
    $region31: #{tpu_custom_call.1} parent=1 // pred_check_branch
      %68 = sbr.rel (0) target = $region33
    $region32: #{tpu_custom_call.1} parent=1 // pred_region
      _
    $region33: #{tpu_custom_call.1} parent=1 // pred_fallthru
      _
    // Predicated region
    $region34: #{tpu_custom_call.1} parent=1 // pred_check
      _
    $region35: #{tpu_custom_call.1} parent=1 // pred_check_branch
      %70 = sbr.rel (0) target = $region37
    $region36: #{tpu_custom_call.1} parent=1 // pred_region
      %71 = dma.done [#allocation7], 256
    $region37: #{tpu_custom_call.1} parent=1 // pred_fallthru
      _
    // Predicated region
    $region38: #{tpu_custom_call.1} parent=1 // pred_check
      _
    $region39: #{tpu_custom_call.1} parent=1 // pred_check_branch
      %73 = sbr.rel (0) target = $region41
    $region40: #{tpu_custom_call.1} parent=1 // pred_region
      %74 = dma.done [#allocation10], 256
    $region41: #{tpu_custom_call.1} parent=1 // pred_fallthru
      _
    // Predicated region
    $region42: #{tpu_custom_call.1} parent=1 // pred_check
      _
    $region43: #{tpu_custom_call.1} parent=1 // pred_check_branch
      %76 = sbr.rel (0) target = $region45
    $region44: #{tpu_custom_call.1} parent=1 // pred_region
      %77 = dma.done [#allocation10], 2048
    $region45: #{tpu_custom_call.1} parent=1 // pred_fallthru
      _
    // Predicated region
    $region46: #{tpu_custom_call.1} parent=1 // pred_check
      _
    $region47: #{tpu_custom_call.1} parent=1 // pred_check_branch
      %80 = sbr.rel target = $region49
    $region48: #{tpu_custom_call.1} parent=1 // pred_region
      %81 = sst [smem:[#allocation18]] [#allocation17]
      %82 = sst [smem:[#allocation19]] [#allocation16]
    $region49: #{tpu_custom_call.1} parent=1 // pred_fallthru
      _
    %84 = shalt.err (0)
    %s86 = sshll.u32 [#allocation2], 4
    %s87 = int_to_ptr.vmem [resolvable:$true] %s86
    %89 = dma.hbm_to_vmem [thread:$0]  %s5, 4096, %s87, [#allocation5]
    %s90 = scalar_lea.sflag [#allocation5], 1
    // Predicated region
    $region50: #{tpu_custom_call.1} parent=1 // pred_check
      _
    $region51: #{tpu_custom_call.1} parent=1 // pred_check_branch
      %92 = sbr.rel target = $region53
    $region52: #{tpu_custom_call.1} parent=1 // pred_region
      %93 = sst [smem:[#allocation18]] [#allocation21]
      %94 = sst [smem:[#allocation19]] [#allocation20]
    $region53: #{tpu_custom_call.1} parent=1 // pred_fallthru
      _
    %96 = shalt.err (0)
    %s98 = sshll.u32 [#allocation3], 4
    %s99 = int_to_ptr.vmem [resolvable:$true] %s98
    %101 = dma.hbm_to_vmem [thread:$0]  %s6, 2048, %s99, %s90
    %s102 = scalar_lea.sflag [#allocation5], 2
    // Predicated region
    $region54: #{tpu_custom_call.1} parent=1 // pred_check
      _
    $region55: #{tpu_custom_call.1} parent=1 // pred_check_branch
      %104 = sbr.rel target = $region57
    $region56: #{tpu_custom_call.1} parent=1 // pred_region
      %105 = sst [smem:[#allocation18]] [#allocation23]
      %106 = sst [smem:[#allocation19]] [#allocation22]
    $region57: #{tpu_custom_call.1} parent=1 // pred_fallthru
      _
    %108 = shalt.err (0)
    %s110 = sshll.u32 [#allocation4], 4
    %s111 = int_to_ptr.vmem [resolvable:$true] %s110
    %113 = dma.hbm_to_vmem [thread:$0]  %s9, 2048, %s111, %s102
    %v114 = vld [vmem:[%s3] sm:$0x3]
    %v115 = vld [vmem:[%s4] sm:$0x3]
    %v116 = vld [vmem:[%s7] sm:$0x1]
    %v117 = vld [vmem:[%s8] sm:$0x1]
    %v118 = vld [vmem:[%s10] sm:$0x3]
    %v119 = vld [vmem:[#allocation6] sm:$0xff]
    %v120 = vld [vmem:[#allocation6 + $0x8] sm:$0xff]
    %v121 = vpack.c.bf16 %v120, %v119
    %v122 = vld [vmem:[#allocation11] sm:$0xff]
    %v123 = vld [vmem:[#allocation11 + $0x8] sm:$0xff]
    %v124 = vld [vmem:[#allocation11 + $0x10] sm:$0xff]
    %v125 = vld [vmem:[#allocation11 + $0x18] sm:$0xff]
    %v126 = vld [vmem:[#allocation11 + $0x20] sm:$0xff]
    %v127 = vld [vmem:[#allocation11 + $0x28] sm:$0xff]
    %v128 = vld [vmem:[#allocation11 + $0x30] sm:$0xff]
    %v129 = vld [vmem:[#allocation11 + $0x38] sm:$0xff]
    %v130 = vld [vmem:[#allocation11 + $0x40] sm:$0xff]
    %v131 = vld [vmem:[#allocation11 + $0x48] sm:$0xff]
    %v132 = vld [vmem:[#allocation11 + $0x50] sm:$0xff]
    %v133 = vld [vmem:[#allocation11 + $0x58] sm:$0xff]
    %v134 = vld [vmem:[#allocation11 + $0x60] sm:$0xff]
    %v135 = vld [vmem:[#allocation11 + $0x68] sm:$0xff]
    %v136 = vld [vmem:[#allocation11 + $0x70] sm:$0xff]
    %v137 = vld [vmem:[#allocation11 + $0x78] sm:$0xff]
    %v154 = vunpack.c.l.b16 %v122
    %v155 = vunpack.c.h.b16 %v122
    %v156 = vunpack.c.l.b16 %v123
    %v157 = vunpack.c.h.b16 %v123
    %v158 = vunpack.c.l.b16 %v124
    %v159 = vunpack.c.h.b16 %v124
    %v160 = vunpack.c.l.b16 %v125
    %v161 = vunpack.c.h.b16 %v125
    %v162 = vunpack.c.l.b16 %v126
    %v163 = vunpack.c.h.b16 %v126
    %v164 = vunpack.c.l.b16 %v127
    %v165 = vunpack.c.h.b16 %v127
    %v166 = vunpack.c.l.b16 %v128
    %v167 = vunpack.c.h.b16 %v128
    %v168 = vunpack.c.l.b16 %v129
    %v169 = vunpack.c.h.b16 %v129
    %v170 = vunpack.c.l.b16 %v130
    %v171 = vunpack.c.h.b16 %v130
    %v172 = vunpack.c.l.b16 %v131
    %v173 = vunpack.c.h.b16 %v131
    %v174 = vunpack.c.l.b16 %v132
    %v175 = vunpack.c.h.b16 %v132
    %v176 = vunpack.c.l.b16 %v133
    %v177 = vunpack.c.h.b16 %v133
    %v178 = vunpack.c.l.b16 %v134
    %v179 = vunpack.c.h.b16 %v134
    %v180 = vunpack.c.l.b16 %v135
    %v181 = vunpack.c.h.b16 %v135
    %v182 = vunpack.c.l.b16 %v136
    %v183 = vunpack.c.h.b16 %v136
    %v184 = vunpack.c.l.b16 %v137
    %v185 = vunpack.c.h.b16 %v137
    %v186 = vpack.c.b16 %v156, %v154
    %v187 = vpack.c.b16 %v157, %v155
    %v188 = vpack.c.b16 %v160, %v158
    %v189 = vpack.c.b16 %v161, %v159
    %v190 = vpack.c.b16 %v164, %v162
    %v191 = vpack.c.b16 %v165, %v163
    %v192 = vpack.c.b16 %v168, %v166
    %v193 = vpack.c.b16 %v169, %v167
    %v194 = vpack.c.b16 %v172, %v170
    %v195 = vpack.c.b16 %v173, %v171
    %v196 = vpack.c.b16 %v176, %v174
    %v197 = vpack.c.b16 %v177, %v175
    %v198 = vpack.c.b16 %v180, %v178
    %v199 = vpack.c.b16 %v181, %v179
    %v200 = vpack.c.b16 %v184, %v182
    %v201 = vpack.c.b16 %v185, %v183
    %218 = vmatprep.subr.bf16.mxu0 %v201
    %219 = vmatpush1.bf16.msra.mxu0 %v200
    %220 = vmatprep.subr.bf16.mxu0 %v199
    %221 = vmatpush1.bf16.msra.mxu0 %v198
    %222 = vmatprep.subr.bf16.mxu0 %v197
    %223 = vmatpush1.bf16.msra.mxu0 %v196
    %224 = vmatprep.subr.bf16.mxu0 %v195
    %225 = vmatpush1.bf16.msra.mxu0 %v194
    %226 = vmatprep.subr.bf16.mxu0 %v193
    %227 = vmatpush1.bf16.msra.mxu0 %v192
    %228 = vmatprep.subr.bf16.mxu0 %v191
    %229 = vmatpush1.bf16.msra.mxu0 %v190
    %230 = vmatprep.subr.bf16.mxu0 %v189
    %231 = vmatpush1.bf16.msra.mxu0 %v188
    %232 = vmatprep.subr.bf16.mxu0 %v187
    %233 = vmatpush1.bf16.msra.mxu0 %v186
    %234 = vmatprep.subr.bf16.mxu0 0
    %235 = vmatpush2.bf16.msra.mxu0 0
    %236 = vmatprep.subr.bf16.mxu0 0
    %237 = vmatpush2.bf16.msra.mxu0 0
    %238 = vmatprep.subr.bf16.mxu0 0
    %239 = vmatpush2.bf16.msra.mxu0 0
    %240 = vmatprep.subr.bf16.mxu0 0
    %241 = vmatpush2.bf16.msra.mxu0 0
    %242 = vmatprep.subr.bf16.mxu0 0
    %243 = vmatpush2.bf16.msra.mxu0 0
    %244 = vmatprep.subr.bf16.mxu0 0
    %245 = vmatpush2.bf16.msra.mxu0 0
    %246 = vmatprep.subr.bf16.mxu0 0
    %247 = vmatpush2.bf16.msra.mxu0 0
    %248 = vmatprep.subr.bf16.mxu0 0
    %249 = vmatpush2.bf16.msra.mxu0 0
    %250 = vmatprep.mubr.bf16.mxu0 0
    %251 = vmatmul.mubr.bf16.gmra.mxu0 %v121
    %v252 = vpop.f32.mrf.mxu0
    %v253 = vadd.f32 0.0, %v252
    %v254 = vpop.f32.mrf.mxu0
    %v255 = vadd.f32 0.0, %v254
    %v256 = vpop.f32.mrf.mxu0
    %v257 = vadd.f32 0.0, %v256
    %v258 = vpop.f32.mrf.mxu0
    %v259 = vadd.f32 0.0, %v258
    %260 = vdwg.mxu0
    %v261 = vadd.f32 %v253, %v257
    %v262 = vrot.slane %v261, 4
    %v263 = vadd.f32 %v261, %v262
    %v264 = vrot.slane %v263, 2
    %v265 = vadd.f32 %v263, %v264
    %v266 = vrot.slane %v265, 1
    %v267 = vadd.f32 %v265, %v266
    %v268 = vadd.f32 %v255, %v259
    %v269 = vrot.slane %v268, 4
    %v270 = vadd.f32 %v268, %v269
    %v271 = vrot.slane %v270, 2
    %v272 = vadd.f32 %v270, %v271
    %v273 = vrot.slane %v272, 1
    %v274 = vadd.f32 %v272, %v273
    %v275 = vrcp.pop 16.0
    %v276 = vmul.f32 %v267, %v275
    %v277 = vmul.f32 %v274, %v275
    %v278 = vmul.f32 %v253, %v253
    %v279 = vmul.f32 %v255, %v255
    %v280 = vmul.f32 %v257, %v257
    %v281 = vmul.f32 %v259, %v259
    %v282 = vadd.f32 %v278, %v280
    %v283 = vrot.slane %v282, 4
    %v284 = vadd.f32 %v282, %v283
    %v285 = vrot.slane %v284, 2
    %v286 = vadd.f32 %v284, %v285
    %v287 = vrot.slane %v286, 1
    %v288 = vadd.f32 %v286, %v287
    %v289 = vadd.f32 %v279, %v281
    %v290 = vrot.slane %v289, 4
    %v291 = vadd.f32 %v289, %v290
    %v292 = vrot.slane %v291, 2
    %v293 = vadd.f32 %v291, %v292
    %v294 = vrot.slane %v293, 1
    %v295 = vadd.f32 %v293, %v294
    %v296 = vmul.f32 %v288, %v275
    %v297 = vmul.f32 %v295, %v275
    %v298 = vmul.f32 %v276, %v276
    %v299 = vmul.f32 %v277, %v277
    %v300 = vsub.f32 %v296, %v298
    %v301 = vsub.f32 %v297, %v299
    %v302 = vmax.f32 %v300, 0.0
    %v303 = vmax.f32 %v301, 0.0
    %v304 = vadd.f32 %v302, 1e-05
    %v305 = vadd.f32 %v303, 1e-05
    %v306 = vrsqrt.pop %v304
    %v307 = vrsqrt.pop %v305
    %v309 = vlaneseq
    %v310 = vshrl.u32 %v309, 7
    %v311 = vsub.s32 0, %v310
    %v312 = vrot.slane %v114, %v311
    %v313 = vlaneseq
    %v314 = vshrl.u32 %v313, 7
    %v315 = vsub.s32 1, %v314
    %v316 = vrot.slane %v114, %v315
    %v319 = vmul.f32 %v306, %v312
    %v320 = vmul.f32 %v307, %v316
    %v321 = vmul.f32 %v276, %v319
    %v322 = vmul.f32 %v277, %v320
    %v325 = vcombine.low %v321, %v322
    %v327 = vunpack.c.l.s4 1966171168
    %v328 = vunpack.c.0.s8 %v327
    %v329 = vlaneseq
    %v330 = vshrl.u32 %v329, 7
    %v331 = vsub.s32 %v328, %v330
    %v332 = vrot.slane %v325, %v331
    %v334 = vunpack.c.l.s4 1966171168
    %v335 = vunpack.c.0.s8 %v334
    %v336 = vlaneseq
    %v337 = vshrl.u32 %v336, 7
    %v338 = vsub.s32 %v335, %v337
    %v339 = vrot.slane %v332, %v338
    %v341 = vsub.f32 %v115, %v339
    %v342 = vlaneseq
    %v343 = vshrl.u32 %v342, 7
    %v344 = vsub.s32 0, %v343
    %v345 = vrot.slane %v319, %v344
    %v346 = vlaneseq
    %v347 = vshrl.u32 %v346, 7
    %v348 = vsub.s32 0, %v347
    %v349 = vrot.slane %v320, %v348
    %v350 = vmul.f32 %v253, %v345
    %v351 = vmul.f32 %v255, %v349
    %v352 = vmul.f32 %v257, %v345
    %v353 = vmul.f32 %v259, %v349
    %v355 = vlaneseq
    %v356 = vshrl.u32 %v355, 7
    %v357 = vsub.s32 0, %v356
    %v358 = vrot.slane %v341, %v357
    %v359 = vlaneseq
    %v360 = vshrl.u32 %v359, 7
    %v361 = vsub.s32 1, %v360
    %v362 = vrot.slane %v341, %v361
    %v365 = vadd.f32 %v350, %v358
    %v366 = vadd.f32 %v351, %v362
    %v367 = vadd.f32 %v352, %v358
    %v368 = vadd.f32 %v353, %v362
    %v369 = vmax.f32 %v365, 0.0
    %v370 = vmax.f32 %v366, 0.0
    %v371 = vmax.f32 %v367, 0.0
    %v372 = vmax.f32 %v368, 0.0
    %s373 = smul.u32 4, 32
    %s374 = smul.u32 %s373, 2
    %s375 = sshll.u32 %s374, 4
    %376 = dma.done [#allocation5], %s375
    %v377 = vpack.c.bf16 %v371, %v369
    %v378 = vpack.c.bf16 %v372, %v370
    %v379 = vld [vmem:[#allocation2] sm:$0xff]
    %v380 = vld [vmem:[#allocation2 + $0x8] sm:$0xff]
    %v381 = vld [vmem:[#allocation2 + $0x10] sm:$0xff]
    %v382 = vld [vmem:[#allocation2 + $0x18] sm:$0xff]
    %v383 = vld [vmem:[#allocation2 + $0x20] sm:$0xff]
    %v384 = vld [vmem:[#allocation2 + $0x28] sm:$0xff]
    %v385 = vld [vmem:[#allocation2 + $0x30] sm:$0xff]
    %v386 = vld [vmem:[#allocation2 + $0x38] sm:$0xff]
    %v387 = vld [vmem:[#allocation2 + $0x40] sm:$0xff]
    %v388 = vld [vmem:[#allocation2 + $0x48] sm:$0xff]
    %v389 = vld [vmem:[#allocation2 + $0x50] sm:$0xff]
    %v390 = vld [vmem:[#allocation2 + $0x58] sm:$0xff]
    %v391 = vld [vmem:[#allocation2 + $0x60] sm:$0xff]
    %v392 = vld [vmem:[#allocation2 + $0x68] sm:$0xff]
    %v393 = vld [vmem:[#allocation2 + $0x70] sm:$0xff]
    %v394 = vld [vmem:[#allocation2 + $0x78] sm:$0xff]
    %v395 = vld [vmem:[#allocation2 + $0x80] sm:$0xff]
    %v396 = vld [vmem:[#allocation2 + $0x88] sm:$0xff]
    %v397 = vld [vmem:[#allocation2 + $0x90] sm:$0xff]
    %v398 = vld [vmem:[#allocation2 + $0x98] sm:$0xff]
    %v399 = vld [vmem:[#allocation2 + $0xa0] sm:$0xff]
    %v400 = vld [vmem:[#allocation2 + $0xa8] sm:$0xff]
    %v401 = vld [vmem:[#allocation2 + $0xb0] sm:$0xff]
    %v402 = vld [vmem:[#allocation2 + $0xb8] sm:$0xff]
    %v403 = vld [vmem:[#allocation2 + $0xc0] sm:$0xff]
    %v404 = vld [vmem:[#allocation2 + $0xc8] sm:$0xff]
    %v405 = vld [vmem:[#allocation2 + $0xd0] sm:$0xff]
    %v406 = vld [vmem:[#allocation2 + $0xd8] sm:$0xff]
    %v407 = vld [vmem:[#allocation2 + $0xe0] sm:$0xff]
    %v408 = vld [vmem:[#allocation2 + $0xe8] sm:$0xff]
    %v409 = vld [vmem:[#allocation2 + $0xf0] sm:$0xff]
    %v410 = vld [vmem:[#allocation2 + $0xf8] sm:$0xff]
    %v443 = vunpack.c.l.b16 %v379
    %v444 = vunpack.c.h.b16 %v379
    %v445 = vunpack.c.l.b16 %v380
    %v446 = vunpack.c.h.b16 %v380
    %v447 = vunpack.c.l.b16 %v381
    %v448 = vunpack.c.h.b16 %v381
    %v449 = vunpack.c.l.b16 %v382
    %v450 = vunpack.c.h.b16 %v382
    %v451 = vunpack.c.l.b16 %v383
    %v452 = vunpack.c.h.b16 %v383
    %v453 = vunpack.c.l.b16 %v384
    %v454 = vunpack.c.h.b16 %v384
    %v455 = vunpack.c.l.b16 %v385
    %v456 = vunpack.c.h.b16 %v385
    %v457 = vunpack.c.l.b16 %v386
    %v458 = vunpack.c.h.b16 %v386
    %v459 = vunpack.c.l.b16 %v387
    %v460 = vunpack.c.h.b16 %v387
    %v461 = vunpack.c.l.b16 %v388
    %v462 = vunpack.c.h.b16 %v388
    %v463 = vunpack.c.l.b16 %v389
    %v464 = vunpack.c.h.b16 %v389
    %v465 = vunpack.c.l.b16 %v390
    %v466 = vunpack.c.h.b16 %v390
    %v467 = vunpack.c.l.b16 %v391
    %v468 = vunpack.c.h.b16 %v391
    %v469 = vunpack.c.l.b16 %v392
    %v470 = vunpack.c.h.b16 %v392
    %v471 = vunpack.c.l.b16 %v393
    %v472 = vunpack.c.h.b16 %v393
    %v473 = vunpack.c.l.b16 %v394
    %v474 = vunpack.c.h.b16 %v394
    %v475 = vunpack.c.l.b16 %v395
    %v476 = vunpack.c.h.b16 %v395
    %v477 = vunpack.c.l.b16 %v396
    %v478 = vunpack.c.h.b16 %v396
    %v479 = vunpack.c.l.b16 %v397
    %v480 = vunpack.c.h.b16 %v397
    %v481 = vunpack.c.l.b16 %v398
    %v482 = vunpack.c.h.b16 %v398
    %v483 = vunpack.c.l.b16 %v399
    %v484 = vunpack.c.h.b16 %v399
    %v485 = vunpack.c.l.b16 %v400
    %v486 = vunpack.c.h.b16 %v400
    %v487 = vunpack.c.l.b16 %v401
    %v488 = vunpack.c.h.b16 %v401
    %v489 = vunpack.c.l.b16 %v402
    %v490 = vunpack.c.h.b16 %v402
    %v491 = vunpack.c.l.b16 %v403
    %v492 = vunpack.c.h.b16 %v403
    %v493 = vunpack.c.l.b16 %v404
    %v494 = vunpack.c.h.b16 %v404
    %v495 = vunpack.c.l.b16 %v405
    %v496 = vunpack.c.h.b16 %v405
    %v497 = vunpack.c.l.b16 %v406
    %v498 = vunpack.c.h.b16 %v406
    %v499 = vunpack.c.l.b16 %v407
    %v500 = vunpack.c.h.b16 %v407
    %v501 = vunpack.c.l.b16 %v408
    %v502 = vunpack.c.h.b16 %v408
    %v503 = vunpack.c.l.b16 %v409
    %v504 = vunpack.c.h.b16 %v409
    %v505 = vunpack.c.l.b16 %v410
    %v506 = vunpack.c.h.b16 %v410
    %v507 = vpack.c.b16 %v445, %v443
    %v508 = vpack.c.b16 %v446, %v444
    %v509 = vpack.c.b16 %v449, %v447
    %v510 = vpack.c.b16 %v450, %v448
    %v511 = vpack.c.b16 %v453, %v451
    %v512 = vpack.c.b16 %v454, %v452
    %v513 = vpack.c.b16 %v457, %v455
    %v514 = vpack.c.b16 %v458, %v456
    %v515 = vpack.c.b16 %v461, %v459
    %v516 = vpack.c.b16 %v462, %v460
    %v517 = vpack.c.b16 %v465, %v463
    %v518 = vpack.c.b16 %v466, %v464
    %v519 = vpack.c.b16 %v469, %v467
    %v520 = vpack.c.b16 %v470, %v468
    %v521 = vpack.c.b16 %v473, %v471
    %v522 = vpack.c.b16 %v474, %v472
    %v523 = vpack.c.b16 %v477, %v475
    %v524 = vpack.c.b16 %v478, %v476
    %v525 = vpack.c.b16 %v481, %v479
    %v526 = vpack.c.b16 %v482, %v480
    %v527 = vpack.c.b16 %v485, %v483
    %v528 = vpack.c.b16 %v486, %v484
    %v529 = vpack.c.b16 %v489, %v487
    %v530 = vpack.c.b16 %v490, %v488
    %v531 = vpack.c.b16 %v493, %v491
    %v532 = vpack.c.b16 %v494, %v492
    %v533 = vpack.c.b16 %v497, %v495
    %v534 = vpack.c.b16 %v498, %v496
    %v535 = vpack.c.b16 %v501, %v499
    %v536 = vpack.c.b16 %v502, %v500
    %v537 = vpack.c.b16 %v505, %v503
    %v538 = vpack.c.b16 %v506, %v504
    %571 = vmatprep.subr.bf16.mxu0 %v522
    %572 = vmatpush1.bf16.msra.mxu0 %v521
    %573 = vmatprep.subr.bf16.mxu0 %v520
    %574 = vmatpush1.bf16.msra.mxu0 %v519
    %575 = vmatprep.subr.bf16.mxu0 %v518
    %576 = vmatpush1.bf16.msra.mxu0 %v517
    %577 = vmatprep.subr.bf16.mxu0 %v516
    %578 = vmatpush1.bf16.msra.mxu0 %v515
    %579 = vmatprep.subr.bf16.mxu0 %v514
    %580 = vmatpush1.bf16.msra.mxu0 %v513
    %581 = vmatprep.subr.bf16.mxu0 %v512
    %582 = vmatpush1.bf16.msra.mxu0 %v511
    %583 = vmatprep.subr.bf16.mxu0 %v510
    %584 = vmatpush1.bf16.msra.mxu0 %v509
    %585 = vmatprep.subr.bf16.mxu0 %v508
    %586 = vmatpush1.bf16.msra.mxu0 %v507
    %587 = vmatprep.subr.bf16.mxu0 %v538
    %588 = vmatpush2.bf16.msra.mxu0 %v537
    %589 = vmatprep.subr.bf16.mxu0 %v536
    %590 = vmatpush2.bf16.msra.mxu0 %v535
    %591 = vmatprep.subr.bf16.mxu0 %v534
    %592 = vmatpush2.bf16.msra.mxu0 %v533
    %593 = vmatprep.subr.bf16.mxu0 %v532
    %594 = vmatpush2.bf16.msra.mxu0 %v531
    %595 = vmatprep.subr.bf16.mxu0 %v530
    %596 = vmatpush2.bf16.msra.mxu0 %v529
    %597 = vmatprep.subr.bf16.mxu0 %v528
    %598 = vmatpush2.bf16.msra.mxu0 %v527
    %599 = vmatprep.subr.bf16.mxu0 %v526
    %600 = vmatpush2.bf16.msra.mxu0 %v525
    %601 = vmatprep.subr.bf16.mxu0 %v524
    %602 = vmatpush2.bf16.msra.mxu0 %v523
    %603 = vmatprep.mubr.bf16.mxu0 %v378
    %604 = vmatmul.mubr.bf16.gmra.mxu0 %v377
    %v605 = vpop.f32.mrf.mxu0
    %v606 = vadd.f32 0.0, %v605
    %v607 = vpop.f32.mrf.mxu0
    %v608 = vadd.f32 0.0, %v607
    %v609 = vpop.f32.mrf.mxu0
    %v610 = vadd.f32 0.0, %v609
    %v611 = vpop.f32.mrf.mxu0
    %v612 = vadd.f32 0.0, %v611
    %613 = vdwg.mxu0
    %v614 = vadd.f32 %v606, %v610
    %v615 = vrot.slane %v614, 4
    %v616 = vadd.f32 %v614, %v615
    %v617 = vrot.slane %v616, 2
    %v618 = vadd.f32 %v616, %v617
    %v619 = vrot.slane %v618, 1
    %v620 = vadd.f32 %v618, %v619
    %v621 = vadd.f32 %v608, %v612
    %v622 = vrot.slane %v621, 4
    %v623 = vadd.f32 %v621, %v622
    %v624 = vrot.slane %v623, 2
    %v625 = vadd.f32 %v623, %v624
    %v626 = vrot.slane %v625, 1
    %v627 = vadd.f32 %v625, %v626
    %v628 = vmul.f32 %v620, %v275
    %v629 = vmul.f32 %v627, %v275
    %v630 = vmul.f32 %v606, %v606
    %v631 = vmul.f32 %v608, %v608
    %v632 = vmul.f32 %v610, %v610
    %v633 = vmul.f32 %v612, %v612
    %v634 = vadd.f32 %v630, %v632
    %v635 = vrot.slane %v634, 4
    %v636 = vadd.f32 %v634, %v635
    %v637 = vrot.slane %v636, 2
    %v638 = vadd.f32 %v636, %v637
    %v639 = vrot.slane %v638, 1
    %v640 = vadd.f32 %v638, %v639
    %v641 = vadd.f32 %v631, %v633
    %v642 = vrot.slane %v641, 4
    %v643 = vadd.f32 %v641, %v642
    %v644 = vrot.slane %v643, 2
    %v645 = vadd.f32 %v643, %v644
    %v646 = vrot.slane %v645, 1
    %v647 = vadd.f32 %v645, %v646
    %v648 = vmul.f32 %v640, %v275
    %v649 = vmul.f32 %v647, %v275
    %v650 = vmul.f32 %v628, %v628
    %v651 = vmul.f32 %v629, %v629
    %v652 = vsub.f32 %v648, %v650
    %v653 = vsub.f32 %v649, %v651
    %v654 = vmax.f32 %v652, 0.0
    %v655 = vmax.f32 %v653, 0.0
    %v656 = vadd.f32 %v654, 1e-05
    %v657 = vadd.f32 %v655, 1e-05
    %v658 = vrsqrt.pop %v656
    %v659 = vrsqrt.pop %v657
    %v660 = vsub.f32 0.0, %v628
    %v661 = vsub.f32 0.0, %v629
    %v662 = vmul.f32 %v660, %v658
    %v663 = vmul.f32 %v661, %v659
    %v664 = vmul.f32 %v606, %v658
    %v665 = vmul.f32 %v608, %v659
    %v666 = vmul.f32 %v610, %v658
    %v667 = vmul.f32 %v612, %v659
    %v668 = vadd.f32 %v664, %v662
    %v669 = vadd.f32 %v665, %v663
    %v670 = vadd.f32 %v666, %v662
    %v671 = vadd.f32 %v667, %v663
    %s672 = smul.u32 %s373, 1
    %s673 = sshll.u32 %s672, 4
    %674 = dma.done %s90, %s673
    %v675 = vpack.c.bf16 %v670, %v668
    %v676 = vpack.c.bf16 %v671, %v669
    %v677 = vld [vmem:[#allocation3] sm:$0xf]
    %v678 = vld [vmem:[#allocation3 + $0x4] sm:$0xf]
    %v679 = vld [vmem:[#allocation3 + $0x8] sm:$0xf]
    %v680 = vld [vmem:[#allocation3 + $0xc] sm:$0xf]
    %v681 = vld [vmem:[#allocation3 + $0x10] sm:$0xf]
    %v682 = vld [vmem:[#allocation3 + $0x14] sm:$0xf]
    %v683 = vld [vmem:[#allocation3 + $0x18] sm:$0xf]
    %v684 = vld [vmem:[#allocation3 + $0x1c] sm:$0xf]
    %v685 = vld [vmem:[#allocation3 + $0x20] sm:$0xf]
    %v686 = vld [vmem:[#allocation3 + $0x24] sm:$0xf]
    %v687 = vld [vmem:[#allocation3 + $0x28] sm:$0xf]
    %v688 = vld [vmem:[#allocation3 + $0x2c] sm:$0xf]
    %v689 = vld [vmem:[#allocation3 + $0x30] sm:$0xf]
    %v690 = vld [vmem:[#allocation3 + $0x34] sm:$0xf]
    %v691 = vld [vmem:[#allocation3 + $0x38] sm:$0xf]
    %v692 = vld [vmem:[#allocation3 + $0x3c] sm:$0xf]
    %v693 = vld [vmem:[#allocation3 + $0x40] sm:$0xf]
    %v694 = vld [vmem:[#allocation3 + $0x44] sm:$0xf]
    %v695 = vld [vmem:[#allocation3 + $0x48] sm:$0xf]
    %v696 = vld [vmem:[#allocation3 + $0x4c] sm:$0xf]
    %v697 = vld [vmem:[#allocation3 + $0x50] sm:$0xf]
    %v698 = vld [vmem:[#allocation3 + $0x54] sm:$0xf]
    %v699 = vld [vmem:[#allocation3 + $0x58] sm:$0xf]
    %v700 = vld [vmem:[#allocation3 + $0x5c] sm:$0xf]
    %v701 = vld [vmem:[#allocation3 + $0x60] sm:$0xf]
    %v702 = vld [vmem:[#allocation3 + $0x64] sm:$0xf]
    %v703 = vld [vmem:[#allocation3 + $0x68] sm:$0xf]
    %v704 = vld [vmem:[#allocation3 + $0x6c] sm:$0xf]
    %v705 = vld [vmem:[#allocation3 + $0x70] sm:$0xf]
    %v706 = vld [vmem:[#allocation3 + $0x74] sm:$0xf]
    %v707 = vld [vmem:[#allocation3 + $0x78] sm:$0xf]
    %v708 = vld [vmem:[#allocation3 + $0x7c] sm:$0xf]
    %v741 = vunpack.c.l.b16 %v677
    %v742 = vunpack.c.l.b16 %v678
    %v743 = vunpack.c.l.b16 %v679
    %v744 = vunpack.c.l.b16 %v680
    %v745 = vunpack.c.l.b16 %v681
    %v746 = vunpack.c.l.b16 %v682
    %v747 = vunpack.c.l.b16 %v683
    %v748 = vunpack.c.l.b16 %v684
    %v749 = vunpack.c.l.b16 %v685
    %v750 = vunpack.c.l.b16 %v686
    %v751 = vunpack.c.l.b16 %v687
    %v752 = vunpack.c.l.b16 %v688
    %v753 = vunpack.c.l.b16 %v689
    %v754 = vunpack.c.l.b16 %v690
    %v755 = vunpack.c.l.b16 %v691
    %v756 = vunpack.c.l.b16 %v692
    %v757 = vunpack.c.l.b16 %v693
    %v758 = vunpack.c.l.b16 %v694
    %v759 = vunpack.c.l.b16 %v695
    %v760 = vunpack.c.l.b16 %v696
    %v761 = vunpack.c.l.b16 %v697
    %v762 = vunpack.c.l.b16 %v698
    %v763 = vunpack.c.l.b16 %v699
    %v764 = vunpack.c.l.b16 %v700
    %v765 = vunpack.c.l.b16 %v701
    %v766 = vunpack.c.l.b16 %v702
    %v767 = vunpack.c.l.b16 %v703
    %v768 = vunpack.c.l.b16 %v704
    %v769 = vunpack.c.l.b16 %v705
    %v770 = vunpack.c.l.b16 %v706
    %v771 = vunpack.c.l.b16 %v707
    %v772 = vunpack.c.l.b16 %v708
    %v773 = vpack.c.b16 %v742, %v741
    %v774 = vpack.c.b16 %v744, %v743
    %v775 = vpack.c.b16 %v746, %v745
    %v776 = vpack.c.b16 %v748, %v747
    %v777 = vpack.c.b16 %v750, %v749
    %v778 = vpack.c.b16 %v752, %v751
    %v779 = vpack.c.b16 %v754, %v753
    %v780 = vpack.c.b16 %v756, %v755
    %v781 = vpack.c.b16 %v758, %v757
    %v782 = vpack.c.b16 %v760, %v759
    %v783 = vpack.c.b16 %v762, %v761
    %v784 = vpack.c.b16 %v764, %v763
    %v785 = vpack.c.b16 %v766, %v765
    %v786 = vpack.c.b16 %v768, %v767
    %v787 = vpack.c.b16 %v770, %v769
    %v788 = vpack.c.b16 %v772, %v771
    %805 = vmatprep.subr.bf16.mxu0 0
    %806 = vmatpush1.bf16.msra.mxu0 %v780
    %807 = vmatprep.subr.bf16.mxu0 0
    %808 = vmatpush1.bf16.msra.mxu0 %v779
    %809 = vmatprep.subr.bf16.mxu0 0
    %810 = vmatpush1.bf16.msra.mxu0 %v778
    %811 = vmatprep.subr.bf16.mxu0 0
    %812 = vmatpush1.bf16.msra.mxu0 %v777
    %813 = vmatprep.subr.bf16.mxu0 0
    %814 = vmatpush1.bf16.msra.mxu0 %v776
    %815 = vmatprep.subr.bf16.mxu0 0
    %816 = vmatpush1.bf16.msra.mxu0 %v775
    %817 = vmatprep.subr.bf16.mxu0 0
    %818 = vmatpush1.bf16.msra.mxu0 %v774
    %819 = vmatprep.subr.bf16.mxu0 0
    %820 = vmatpush1.bf16.msra.mxu0 %v773
    %821 = vmatprep.subr.bf16.mxu0 0
    %822 = vmatpush2.bf16.msra.mxu0 %v788
    %823 = vmatprep.subr.bf16.mxu0 0
    %824 = vmatpush2.bf16.msra.mxu0 %v787
    %825 = vmatprep.subr.bf16.mxu0 0
    %826 = vmatpush2.bf16.msra.mxu0 %v786
    %827 = vmatprep.subr.bf16.mxu0 0
    %828 = vmatpush2.bf16.msra.mxu0 %v785
    %829 = vmatprep.subr.bf16.mxu0 0
    %830 = vmatpush2.bf16.msra.mxu0 %v784
    %831 = vmatprep.subr.bf16.mxu0 0
    %832 = vmatpush2.bf16.msra.mxu0 %v783
    %833 = vmatprep.subr.bf16.mxu0 0
    %834 = vmatpush2.bf16.msra.mxu0 %v782
    %835 = vmatprep.subr.bf16.mxu0 0
    %836 = vmatpush2.bf16.msra.mxu0 %v781
    %837 = vmatprep.mubr.bf16.mxu0 %v676
    %838 = vmatmul.mubr.bf16.gmra.mxu0 %v675
    %v839 = vpop.f32.mrf.mxu0
    %v840 = vadd.f32 0.0, %v839
    %v841 = vpop.f32.mrf.mxu0
    %v842 = vpop.f32.mrf.mxu0
    %v843 = vadd.f32 0.0, %v842
    %v844 = vpop.f32.mrf.mxu0
    %845 = vdwg.mxu0
    %v846 = vadd.f32 %v840, %v843
    %v847 = vrot.slane %v846, 4
    %v848 = vadd.f32 %v846, %v847
    %v849 = vrot.slane %v848, 2
    %v850 = vadd.f32 %v848, %v849
    %v851 = vrot.slane %v850, 1
    %v852 = vadd.f32 %v850, %v851
    %v853 = vmul.f32 %v852, %v275
    %v854 = vmul.f32 %v840, %v840
    %v855 = vmul.f32 %v843, %v843
    %v856 = vadd.f32 %v854, %v855
    %v857 = vrot.slane %v856, 4
    %v858 = vadd.f32 %v856, %v857
    %v859 = vrot.slane %v858, 2
    %v860 = vadd.f32 %v858, %v859
    %v861 = vrot.slane %v860, 1
    %v862 = vadd.f32 %v860, %v861
    %v863 = vmul.f32 %v862, %v275
    %v864 = vmul.f32 %v853, %v853
    %v865 = vsub.f32 %v863, %v864
    %v866 = vmax.f32 %v865, 0.0
    %v867 = vadd.f32 %v866, 1e-05
    %v868 = vrsqrt.pop %v867
    %v869 = vmul.f32 %v868, %v116
    %v870 = vmul.f32 %v853, %v869
    %v871 = vsub.f32 %v117, %v870
    %v872 = vlaneseq
    %v873 = vshrl.u32 %v872, 7
    %v874 = vsub.s32 0, %v873
    %v875 = vrot.slane %v869, %v874
    %v876 = vmul.f32 %v840, %v875
    %v877 = vmul.f32 %v843, %v875
    %v879 = vlaneseq
    %v880 = vshrl.u32 %v879, 7
    %v881 = vsub.s32 0, %v880
    %v882 = vrot.slane %v871, %v881
    %v884 = vadd.f32 %v876, %v882
    %v885 = vadd.f32 %v877, %v882
    %v886 = vmax.f32 %v884, 0.0
    %v887 = vmax.f32 %v885, 0.0
    %s888 = smul.u32 4, 16
    %s889 = smul.u32 %s888, 2
    %s890 = sshll.u32 %s889, 4
    %891 = dma.done %s102, %s890
    %v892 = vpack.c.bf16 %v887, %v886
    %v893 = vld [vmem:[#allocation4] sm:$0xff]
    %v894 = vld [vmem:[#allocation4 + $0x8] sm:$0xff]
    %v895 = vld [vmem:[#allocation4 + $0x10] sm:$0xff]
    %v896 = vld [vmem:[#allocation4 + $0x18] sm:$0xff]
    %v897 = vld [vmem:[#allocation4 + $0x20] sm:$0xff]
    %v898 = vld [vmem:[#allocation4 + $0x28] sm:$0xff]
    %v899 = vld [vmem:[#allocation4 + $0x30] sm:$0xff]
    %v900 = vld [vmem:[#allocation4 + $0x38] sm:$0xff]
    %v901 = vld [vmem:[#allocation4 + $0x40] sm:$0xff]
    %v902 = vld [vmem:[#allocation4 + $0x48] sm:$0xff]
    %v903 = vld [vmem:[#allocation4 + $0x50] sm:$0xff]
    %v904 = vld [vmem:[#allocation4 + $0x58] sm:$0xff]
    %v905 = vld [vmem:[#allocation4 + $0x60] sm:$0xff]
    %v906 = vld [vmem:[#allocation4 + $0x68] sm:$0xff]
    %v907 = vld [vmem:[#allocation4 + $0x70] sm:$0xff]
    %v908 = vld [vmem:[#allocation4 + $0x78] sm:$0xff]
    %v910 = vlaneseq
    %v911 = vshrl.u32 %v910, 7
    %v912 = vsub.s32 0, %v911
    %v913 = vrot.slane %v118, %v912
    %v914 = vlaneseq
    %v915 = vshrl.u32 %v914, 7
    %v916 = vsub.s32 1, %v915
    %v917 = vrot.slane %v118, %v916
    %v936 = vunpack.c.l.b16 %v893
    %v937 = vunpack.c.h.b16 %v893
    %v938 = vunpack.c.l.b16 %v894
    %v939 = vunpack.c.h.b16 %v894
    %v940 = vunpack.c.l.b16 %v895
    %v941 = vunpack.c.h.b16 %v895
    %v942 = vunpack.c.l.b16 %v896
    %v943 = vunpack.c.h.b16 %v896
    %v944 = vunpack.c.l.b16 %v897
    %v945 = vunpack.c.h.b16 %v897
    %v946 = vunpack.c.l.b16 %v898
    %v947 = vunpack.c.h.b16 %v898
    %v948 = vunpack.c.l.b16 %v899
    %v949 = vunpack.c.h.b16 %v899
    %v950 = vunpack.c.l.b16 %v900
    %v951 = vunpack.c.h.b16 %v900
    %v952 = vunpack.c.l.b16 %v901
    %v953 = vunpack.c.h.b16 %v901
    %v954 = vunpack.c.l.b16 %v902
    %v955 = vunpack.c.h.b16 %v902
    %v956 = vunpack.c.l.b16 %v903
    %v957 = vunpack.c.h.b16 %v903
    %v958 = vunpack.c.l.b16 %v904
    %v959 = vunpack.c.h.b16 %v904
    %v960 = vunpack.c.l.b16 %v905
    %v961 = vunpack.c.h.b16 %v905
    %v962 = vunpack.c.l.b16 %v906
    %v963 = vunpack.c.h.b16 %v906
    %v964 = vunpack.c.l.b16 %v907
    %v965 = vunpack.c.h.b16 %v907
    %v966 = vunpack.c.l.b16 %v908
    %v967 = vunpack.c.h.b16 %v908
    %v968 = vpack.c.b16 %v938, %v936
    %v969 = vpack.c.b16 %v939, %v937
    %v970 = vpack.c.b16 %v942, %v940
    %v971 = vpack.c.b16 %v943, %v941
    %v972 = vpack.c.b16 %v946, %v944
    %v973 = vpack.c.b16 %v947, %v945
    %v974 = vpack.c.b16 %v950, %v948
    %v975 = vpack.c.b16 %v951, %v949
    %v976 = vpack.c.b16 %v954, %v952
    %v977 = vpack.c.b16 %v955, %v953
    %v978 = vpack.c.b16 %v958, %v956
    %v979 = vpack.c.b16 %v959, %v957
    %v980 = vpack.c.b16 %v962, %v960
    %v981 = vpack.c.b16 %v963, %v961
    %v982 = vpack.c.b16 %v966, %v964
    %v983 = vpack.c.b16 %v967, %v965
    %1000 = vmatprep.subr.bf16.mxu0 %v983
    %1001 = vmatpush1.bf16.msra.mxu0 %v982
    %1002 = vmatprep.subr.bf16.mxu0 %v981
    %1003 = vmatpush1.bf16.msra.mxu0 %v980
    %1004 = vmatprep.subr.bf16.mxu0 %v979
    %1005 = vmatpush1.bf16.msra.mxu0 %v978
    %1006 = vmatprep.subr.bf16.mxu0 %v977
    %1007 = vmatpush1.bf16.msra.mxu0 %v976
    %1008 = vmatprep.subr.bf16.mxu0 %v975
    %1009 = vmatpush1.bf16.msra.mxu0 %v974
    %1010 = vmatprep.subr.bf16.mxu0 %v973
    %1011 = vmatpush1.bf16.msra.mxu0 %v972
    %1012 = vmatprep.subr.bf16.mxu0 %v971
    %1013 = vmatpush1.bf16.msra.mxu0 %v970
    %1014 = vmatprep.subr.bf16.mxu0 %v969
    %1015 = vmatpush1.bf16.msra.mxu0 %v968
    %1016 = vmatprep.subr.bf16.mxu0 0
    %1017 = vmatpush2.bf16.msra.mxu0 0
    %1018 = vmatprep.subr.bf16.mxu0 0
    %1019 = vmatpush2.bf16.msra.mxu0 0
    %1020 = vmatprep.subr.bf16.mxu0 0
    %1021 = vmatpush2.bf16.msra.mxu0 0
    %1022 = vmatprep.subr.bf16.mxu0 0
    %1023 = vmatpush2.bf16.msra.mxu0 0
    %1024 = vmatprep.subr.bf16.mxu0 0
    %1025 = vmatpush2.bf16.msra.mxu0 0
    %1026 = vmatprep.subr.bf16.mxu0 0
    %1027 = vmatpush2.bf16.msra.mxu0 0
    %1028 = vmatprep.subr.bf16.mxu0 0
    %1029 = vmatpush2.bf16.msra.mxu0 0
    %1030 = vmatprep.subr.bf16.mxu0 0
    %1031 = vmatpush2.bf16.msra.mxu0 0
    %1032 = vmatprep.mubr.bf16.mxu0 0
    %1033 = vmatmul.mubr.bf16.gmra.mxu0 %v892
    %v1034 = vpop.f32.mrf.mxu0
    %v1035 = vadd.f32 %v913, %v1034
    %v1036 = vpop.f32.mrf.mxu0
    %v1037 = vadd.f32 %v917, %v1036
    %v1038 = vpop.f32.mrf.mxu0
    %v1039 = vadd.f32 %v913, %v1038
    %v1040 = vpop.f32.mrf.mxu0
    %v1041 = vadd.f32 %v917, %v1040
    %1042 = vdwg.mxu0
    %v1043 = vmul.f32 %v1035, %v1035
    %v1044 = vmul.f32 %v1037, %v1037
    %v1045 = vmul.f32 %v1039, %v1039
    %v1046 = vmul.f32 %v1041, %v1041
    %v1047 = vadd.f32 %v1043, %v1044
    %1048 = vadd.xlane.f32.xlu0 %v1047
    %v1049 = vpop.xlane.xlu0 %1048
    %v1050 = vadd.f32 %v1045, %v1046
    %1051 = vadd.xlane.f32.xlu0 %v1050
    %v1052 = vpop.xlane.xlu0 %1051
    %v1053 = vmax.f32 %v1049, 1e-24
    %v1054 = vmax.f32 %v1052, 1e-24
    %v1055 = vrsqrt.pop %v1053
    %v1056 = vrsqrt.pop %v1054
    %v1057 = vmul.f32 %v1035, %v1055
    %v1058 = vmul.f32 %v1037, %v1055
    %v1059 = vmul.f32 %v1039, %v1056
    %v1060 = vmul.f32 %v1041, %v1056
    %v1061 = vpack.c.bf16 %v1059, %v1057
    %v1062 = vpack.c.bf16 %v1060, %v1058
    %v1063 = vmul.f32 %v668, %v668
    %v1064 = vmul.f32 %v669, %v669
    %v1065 = vmul.f32 %v670, %v670
    %v1066 = vmul.f32 %v671, %v671
    %v1067 = vadd.f32 %v1063, %v1064
    %1068 = vadd.xlane.f32.xlu0 %v1067
    %v1069 = vpop.xlane.xlu0 %1068
    %v1070 = vadd.f32 %v1065, %v1066
    %1071 = vadd.xlane.f32.xlu0 %v1070
    %v1072 = vpop.xlane.xlu0 %1071
    %v1073 = vmax.f32 %v1069, 1e-24
    %v1074 = vmax.f32 %v1072, 1e-24
    %v1075 = vrsqrt.pop %v1073
    %v1076 = vrsqrt.pop %v1074
    %v1077 = vmul.f32 %v668, %v1075
    %v1078 = vmul.f32 %v669, %v1075
    %v1079 = vmul.f32 %v670, %v1076
    %v1080 = vmul.f32 %v671, %v1076
    %v1081 = vmul.f32 %v1077, 20.0
    %v1082 = vmul.f32 %v1078, 20.0
    %v1083 = vmul.f32 %v1079, 20.0
    %v1084 = vmul.f32 %v1080, 20.0
    %v1085 = vmul.f32 %v1081, 1.442695
    %v1086 = vpow.pop %v1085
    %v1087 = vmul.f32 %v1082, 1.442695
    %v1088 = vpow.pop %v1087
    %v1089 = vmul.f32 %v1083, 1.442695
    %v1090 = vpow.pop %v1089
    %v1091 = vmul.f32 %v1084, 1.442695
    %v1092 = vpow.pop %v1091
    %v1093 = vadd.f32 %v1086, %v1088
    %1094 = vadd.xlane.f32.xlu0 %v1093
    %v1095 = vpop.xlane.xlu0 %1094
    %v1096 = vadd.f32 %v1090, %v1092
    %1097 = vadd.xlane.f32.xlu0 %v1096
    %v1098 = vpop.xlane.xlu0 %1097
    %v1099 = vrcp.pop %v1095
    %v1100 = vmul.f32 1.0, %v1099
    %v1101 = vrcp.pop %v1098
    %v1102 = vmul.f32 1.0, %v1101
    %v1103 = vmul.f32 %v1086, %v1100
    %v1104 = vmul.f32 %v1088, %v1100
    %v1105 = vmul.f32 %v1090, %v1102
    %v1106 = vmul.f32 %v1092, %v1102
    %v1107 = vpack.c.bf16 %v1105, %v1103
    %v1108 = vpack.c.bf16 %v1106, %v1104
    %v1109 = vld [vmem:[#allocation9] sm:$0xff]
    %v1110 = vld [vmem:[#allocation9 + $0x8] sm:$0xff]
    %v1111 = vpack.c.bf16 %v1110, %v1109
    %v1112 = vld [vmem:[#allocation11] sm:$0xff]
    %v1113 = vld [vmem:[#allocation11 + $0x8] sm:$0xff]
    %v1114 = vld [vmem:[#allocation11 + $0x10] sm:$0xff]
    %v1115 = vld [vmem:[#allocation11 + $0x18] sm:$0xff]
    %v1116 = vld [vmem:[#allocation11 + $0x20] sm:$0xff]
    %v1117 = vld [vmem:[#allocation11 + $0x28] sm:$0xff]
    %v1118 = vld [vmem:[#allocation11 + $0x30] sm:$0xff]
    %v1119 = vld [vmem:[#allocation11 + $0x38] sm:$0xff]
    %v1120 = vld [vmem:[#allocation11 + $0x40] sm:$0xff]
    %v1121 = vld [vmem:[#allocation11 + $0x48] sm:$0xff]
    %v1122 = vld [vmem:[#allocation11 + $0x50] sm:$0xff]
    %v1123 = vld [vmem:[#allocation11 + $0x58] sm:$0xff]
    %v1124 = vld [vmem:[#allocation11 + $0x60] sm:$0xff]
    %v1125 = vld [vmem:[#allocation11 + $0x68] sm:$0xff]
    %v1126 = vld [vmem:[#allocation11 + $0x70] sm:$0xff]
    %v1127 = vld [vmem:[#allocation11 + $0x78] sm:$0xff]
    %v1144 = vunpack.c.l.b16 %v1112
    %v1145 = vunpack.c.h.b16 %v1112
    %v1146 = vunpack.c.l.b16 %v1113
    %v1147 = vunpack.c.h.b16 %v1113
    %v1148 = vunpack.c.l.b16 %v1114
    %v1149 = vunpack.c.h.b16 %v1114
    %v1150 = vunpack.c.l.b16 %v1115
    %v1151 = vunpack.c.h.b16 %v1115
    %v1152 = vunpack.c.l.b16 %v1116
    %v1153 = vunpack.c.h.b16 %v1116
    %v1154 = vunpack.c.l.b16 %v1117
    %v1155 = vunpack.c.h.b16 %v1117
    %v1156 = vunpack.c.l.b16 %v1118
    %v1157 = vunpack.c.h.b16 %v1118
    %v1158 = vunpack.c.l.b16 %v1119
    %v1159 = vunpack.c.h.b16 %v1119
    %v1160 = vunpack.c.l.b16 %v1120
    %v1161 = vunpack.c.h.b16 %v1120
    %v1162 = vunpack.c.l.b16 %v1121
    %v1163 = vunpack.c.h.b16 %v1121
    %v1164 = vunpack.c.l.b16 %v1122
    %v1165 = vunpack.c.h.b16 %v1122
    %v1166 = vunpack.c.l.b16 %v1123
    %v1167 = vunpack.c.h.b16 %v1123
    %v1168 = vunpack.c.l.b16 %v1124
    %v1169 = vunpack.c.h.b16 %v1124
    %v1170 = vunpack.c.l.b16 %v1125
    %v1171 = vunpack.c.h.b16 %v1125
    %v1172 = vunpack.c.l.b16 %v1126
    %v1173 = vunpack.c.h.b16 %v1126
    %v1174 = vunpack.c.l.b16 %v1127
    %v1175 = vunpack.c.h.b16 %v1127
    %v1176 = vpack.c.b16 %v1146, %v1144
    %v1177 = vpack.c.b16 %v1147, %v1145
    %v1178 = vpack.c.b16 %v1150, %v1148
    %v1179 = vpack.c.b16 %v1151, %v1149
    %v1180 = vpack.c.b16 %v1154, %v1152
    %v1181 = vpack.c.b16 %v1155, %v1153
    %v1182 = vpack.c.b16 %v1158, %v1156
    %v1183 = vpack.c.b16 %v1159, %v1157
    %v1184 = vpack.c.b16 %v1162, %v1160
    %v1185 = vpack.c.b16 %v1163, %v1161
    %v1186 = vpack.c.b16 %v1166, %v1164
    %v1187 = vpack.c.b16 %v1167, %v1165
    %v1188 = vpack.c.b16 %v1170, %v1168
    %v1189 = vpack.c.b16 %v1171, %v1169
    %v1190 = vpack.c.b16 %v1174, %v1172
    %v1191 = vpack.c.b16 %v1175, %v1173
    %1208 = vmatprep.subr.bf16.mxu0 %v1191
    %1209 = vmatpush1.bf16.msra.mxu0 %v1190
    %1210 = vmatprep.subr.bf16.mxu0 %v1189
    %1211 = vmatpush1.bf16.msra.mxu0 %v1188
    %1212 = vmatprep.subr.bf16.mxu0 %v1187
    %1213 = vmatpush1.bf16.msra.mxu0 %v1186
    %1214 = vmatprep.subr.bf16.mxu0 %v1185
    %1215 = vmatpush1.bf16.msra.mxu0 %v1184
    %1216 = vmatprep.subr.bf16.mxu0 %v1183
    %1217 = vmatpush1.bf16.msra.mxu0 %v1182
    %1218 = vmatprep.subr.bf16.mxu0 %v1181
    %1219 = vmatpush1.bf16.msra.mxu0 %v1180
    %1220 = vmatprep.subr.bf16.mxu0 %v1179
    %1221 = vmatpush1.bf16.msra.mxu0 %v1178
    %1222 = vmatprep.subr.bf16.mxu0 %v1177
    %1223 = vmatpush1.bf16.msra.mxu0 %v1176
    %1224 = vmatprep.subr.bf16.mxu0 0
    %1225 = vmatpush2.bf16.msra.mxu0 0
    %1226 = vmatprep.subr.bf16.mxu0 0
    %1227 = vmatpush2.bf16.msra.mxu0 0
    %1228 = vmatprep.subr.bf16.mxu0 0
    %1229 = vmatpush2.bf16.msra.mxu0 0
    %1230 = vmatprep.subr.bf16.mxu0 0
    %1231 = vmatpush2.bf16.msra.mxu0 0
    %1232 = vmatprep.subr.bf16.mxu0 0
    %1233 = vmatpush2.bf16.msra.mxu0 0
    %1234 = vmatprep.subr.bf16.mxu0 0
    %1235 = vmatpush2.bf16.msra.mxu0 0
    %1236 = vmatprep.subr.bf16.mxu0 0
    %1237 = vmatpush2.bf16.msra.mxu0 0
    %1238 = vmatprep.subr.bf16.mxu0 0
    %1239 = vmatpush2.bf16.msra.mxu0 0
    %1240 = vmatprep.mubr.bf16.mxu0 0
    %1241 = vmatmul.mubr.bf16.gmra.mxu0 %v1111
    %v1242 = vpop.f32.mrf.mxu0
    %v1243 = vadd.f32 0.0, %v1242
    %v1244 = vpop.f32.mrf.mxu0
    %v1245 = vadd.f32 0.0, %v1244
    %v1246 = vpop.f32.mrf.mxu0
    %v1247 = vadd.f32 0.0, %v1246
    %v1248 = vpop.f32.mrf.mxu0
    %v1249 = vadd.f32 0.0, %v1248
    %1250 = vdwg.mxu0
    %v1251 = vadd.f32 %v1243, %v1247
    %v1252 = vrot.slane %v1251, 4
    %v1253 = vadd.f32 %v1251, %v1252
    %v1254 = vrot.slane %v1253, 2
    %v1255 = vadd.f32 %v1253, %v1254
    %v1256 = vrot.slane %v1255, 1
    %v1257 = vadd.f32 %v1255, %v1256
    %v1258 = vadd.f32 %v1245, %v1249
    %v1259 = vrot.slane %v1258, 4
    %v1260 = vadd.f32 %v1258, %v1259
    %v1261 = vrot.slane %v1260, 2
    %v1262 = vadd.f32 %v1260, %v1261
    %v1263 = vrot.slane %v1262, 1
    %v1264 = vadd.f32 %v1262, %v1263
    %v1265 = vmul.f32 %v1257, %v275
    %v1266 = vmul.f32 %v1264, %v275
    %v1267 = vmul.f32 %v1243, %v1243
    %v1268 = vmul.f32 %v1245, %v1245
    %v1269 = vmul.f32 %v1247, %v1247
    %v1270 = vmul.f32 %v1249, %v1249
    %v1271 = vadd.f32 %v1267, %v1269
    %v1272 = vrot.slane %v1271, 4
    %v1273 = vadd.f32 %v1271, %v1272
    %v1274 = vrot.slane %v1273, 2
    %v1275 = vadd.f32 %v1273, %v1274
    %v1276 = vrot.slane %v1275, 1
    %v1277 = vadd.f32 %v1275, %v1276
    %v1278 = vadd.f32 %v1268, %v1270
    %v1279 = vrot.slane %v1278, 4
    %v1280 = vadd.f32 %v1278, %v1279
    %v1281 = vrot.slane %v1280, 2
    %v1282 = vadd.f32 %v1280, %v1281
    %v1283 = vrot.slane %v1282, 1
    %v1284 = vadd.f32 %v1282, %v1283
    %v1285 = vmul.f32 %v1277, %v275
    %v1286 = vmul.f32 %v1284, %v275
    %v1287 = vmul.f32 %v1265, %v1265
    %v1288 = vmul.f32 %v1266, %v1266
    %v1289 = vsub.f32 %v1285, %v1287
    %v1290 = vsub.f32 %v1286, %v1288
    %v1291 = vmax.f32 %v1289, 0.0
    %v1292 = vmax.f32 %v1290, 0.0
    %v1293 = vadd.f32 %v1291, 1e-05
    %v1294 = vadd.f32 %v1292, 1e-05
    %v1295 = vrsqrt.pop %v1293
    %v1296 = vrsqrt.pop %v1294
    %v1297 = vmul.f32 %v1295, %v312
    %v1298 = vmul.f32 %v1296, %v316
    %v1299 = vmul.f32 %v1265, %v1297
    %v1300 = vmul.f32 %v1266, %v1298
    %v1303 = vcombine.low %v1299, %v1300
    %v1305 = vunpack.c.l.s4 1966171168
    %v1306 = vunpack.c.0.s8 %v1305
    %v1307 = vlaneseq
    %v1308 = vshrl.u32 %v1307, 7
    %v1309 = vsub.s32 %v1306, %v1308
    %v1310 = vrot.slane %v1303, %v1309
    %v1312 = vunpack.c.l.s4 1966171168
    %v1313 = vunpack.c.0.s8 %v1312
    %v1314 = vlaneseq
    %v1315 = vshrl.u32 %v1314, 7
    %v1316 = vsub.s32 %v1313, %v1315
    %v1317 = vrot.slane %v1310, %v1316
    %v1319 = vsub.f32 %v115, %v1317
    %v1320 = vlaneseq
    %v1321 = vshrl.u32 %v1320, 7
    %v1322 = vsub.s32 0, %v1321
    %v1323 = vrot.slane %v1297, %v1322
    %v1324 = vlaneseq
    %v1325 = vshrl.u32 %v1324, 7
    %v1326 = vsub.s32 0, %v1325
    %v1327 = vrot.slane %v1298, %v1326
    %v1328 = vmul.f32 %v1243, %v1323
    %v1329 = vmul.f32 %v1245, %v1327
    %v1330 = vmul.f32 %v1247, %v1323
    %v1331 = vmul.f32 %v1249, %v1327
    %v1333 = vlaneseq
    %v1334 = vshrl.u32 %v1333, 7
    %v1335 = vsub.s32 0, %v1334
    %v1336 = vrot.slane %v1319, %v1335
    %v1337 = vlaneseq
    %v1338 = vshrl.u32 %v1337, 7
    %v1339 = vsub.s32 1, %v1338
    %v1340 = vrot.slane %v1319, %v1339
    %v1343 = vadd.f32 %v1328, %v1336
    %v1344 = vadd.f32 %v1329, %v1340
    %v1345 = vadd.f32 %v1330, %v1336
    %v1346 = vadd.f32 %v1331, %v1340
    %v1347 = vmax.f32 %v1343, 0.0
    %v1348 = vmax.f32 %v1344, 0.0
    %v1349 = vmax.f32 %v1345, 0.0
    %v1350 = vmax.f32 %v1346, 0.0
    %v1351 = vpack.c.bf16 %v1349, %v1347
    %v1352 = vpack.c.bf16 %v1350, %v1348
    %v1353 = vld [vmem:[#allocation2] sm:$0xff]
    %v1354 = vld [vmem:[#allocation2 + $0x8] sm:$0xff]
    %v1355 = vld [vmem:[#allocation2 + $0x10] sm:$0xff]
    %v1356 = vld [vmem:[#allocation2 + $0x18] sm:$0xff]
    %v1357 = vld [vmem:[#allocation2 + $0x20] sm:$0xff]
    %v1358 = vld [vmem:[#allocation2 + $0x28] sm:$0xff]
    %v1359 = vld [vmem:[#allocation2 + $0x30] sm:$0xff]
    %v1360 = vld [vmem:[#allocation2 + $0x38] sm:$0xff]
    %v1361 = vld [vmem:[#allocation2 + $0x40] sm:$0xff]
    %v1362 = vld [vmem:[#allocation2 + $0x48] sm:$0xff]
    %v1363 = vld [vmem:[#allocation2 + $0x50] sm:$0xff]
    %v1364 = vld [vmem:[#allocation2 + $0x58] sm:$0xff]
    %v1365 = vld [vmem:[#allocation2 + $0x60] sm:$0xff]
    %v1366 = vld [vmem:[#allocation2 + $0x68] sm:$0xff]
    %v1367 = vld [vmem:[#allocation2 + $0x70] sm:$0xff]
    %v1368 = vld [vmem:[#allocation2 + $0x78] sm:$0xff]
    %v1369 = vld [vmem:[#allocation2 + $0x80] sm:$0xff]
    %v1370 = vld [vmem:[#allocation2 + $0x88] sm:$0xff]
    %v1371 = vld [vmem:[#allocation2 + $0x90] sm:$0xff]
    %v1372 = vld [vmem:[#allocation2 + $0x98] sm:$0xff]
    %v1373 = vld [vmem:[#allocation2 + $0xa0] sm:$0xff]
    %v1374 = vld [vmem:[#allocation2 + $0xa8] sm:$0xff]
    %v1375 = vld [vmem:[#allocation2 + $0xb0] sm:$0xff]
    %v1376 = vld [vmem:[#allocation2 + $0xb8] sm:$0xff]
    %v1377 = vld [vmem:[#allocation2 + $0xc0] sm:$0xff]
    %v1378 = vld [vmem:[#allocation2 + $0xc8] sm:$0xff]
    %v1379 = vld [vmem:[#allocation2 + $0xd0] sm:$0xff]
    %v1380 = vld [vmem:[#allocation2 + $0xd8] sm:$0xff]
    %v1381 = vld [vmem:[#allocation2 + $0xe0] sm:$0xff]
    %v1382 = vld [vmem:[#allocation2 + $0xe8] sm:$0xff]
    %v1383 = vld [vmem:[#allocation2 + $0xf0] sm:$0xff]
    %v1384 = vld [vmem:[#allocation2 + $0xf8] sm:$0xff]
    %v1417 = vunpack.c.l.b16 %v1353
    %v1418 = vunpack.c.h.b16 %v1353
    %v1419 = vunpack.c.l.b16 %v1354
    %v1420 = vunpack.c.h.b16 %v1354
    %v1421 = vunpack.c.l.b16 %v1355
    %v1422 = vunpack.c.h.b16 %v1355
    %v1423 = vunpack.c.l.b16 %v1356
    %v1424 = vunpack.c.h.b16 %v1356
    %v1425 = vunpack.c.l.b16 %v1357
    %v1426 = vunpack.c.h.b16 %v1357
    %v1427 = vunpack.c.l.b16 %v1358
    %v1428 = vunpack.c.h.b16 %v1358
    %v1429 = vunpack.c.l.b16 %v1359
    %v1430 = vunpack.c.h.b16 %v1359
    %v1431 = vunpack.c.l.b16 %v1360
    %v1432 = vunpack.c.h.b16 %v1360
    %v1433 = vunpack.c.l.b16 %v1361
    %v1434 = vunpack.c.h.b16 %v1361
    %v1435 = vunpack.c.l.b16 %v1362
    %v1436 = vunpack.c.h.b16 %v1362
    %v1437 = vunpack.c.l.b16 %v1363
    %v1438 = vunpack.c.h.b16 %v1363
    %v1439 = vunpack.c.l.b16 %v1364
    %v1440 = vunpack.c.h.b16 %v1364
    %v1441 = vunpack.c.l.b16 %v1365
    %v1442 = vunpack.c.h.b16 %v1365
    %v1443 = vunpack.c.l.b16 %v1366
    %v1444 = vunpack.c.h.b16 %v1366
    %v1445 = vunpack.c.l.b16 %v1367
    %v1446 = vunpack.c.h.b16 %v1367
    %v1447 = vunpack.c.l.b16 %v1368
    %v1448 = vunpack.c.h.b16 %v1368
    %v1449 = vunpack.c.l.b16 %v1369
    %v1450 = vunpack.c.h.b16 %v1369
    %v1451 = vunpack.c.l.b16 %v1370
    %v1452 = vunpack.c.h.b16 %v1370
    %v1453 = vunpack.c.l.b16 %v1371
    %v1454 = vunpack.c.h.b16 %v1371
    %v1455 = vunpack.c.l.b16 %v1372
    %v1456 = vunpack.c.h.b16 %v1372
    %v1457 = vunpack.c.l.b16 %v1373
    %v1458 = vunpack.c.h.b16 %v1373
    %v1459 = vunpack.c.l.b16 %v1374
    %v1460 = vunpack.c.h.b16 %v1374
    %v1461 = vunpack.c.l.b16 %v1375
    %v1462 = vunpack.c.h.b16 %v1375
    %v1463 = vunpack.c.l.b16 %v1376
    %v1464 = vunpack.c.h.b16 %v1376
    %v1465 = vunpack.c.l.b16 %v1377
    %v1466 = vunpack.c.h.b16 %v1377
    %v1467 = vunpack.c.l.b16 %v1378
    %v1468 = vunpack.c.h.b16 %v1378
    %v1469 = vunpack.c.l.b16 %v1379
    %v1470 = vunpack.c.h.b16 %v1379
    %v1471 = vunpack.c.l.b16 %v1380
    %v1472 = vunpack.c.h.b16 %v1380
    %v1473 = vunpack.c.l.b16 %v1381
    %v1474 = vunpack.c.h.b16 %v1381
    %v1475 = vunpack.c.l.b16 %v1382
    %v1476 = vunpack.c.h.b16 %v1382
    %v1477 = vunpack.c.l.b16 %v1383
    %v1478 = vunpack.c.h.b16 %v1383
    %v1479 = vunpack.c.l.b16 %v1384
    %v1480 = vunpack.c.h.b16 %v1384
    %v1481 = vpack.c.b16 %v1419, %v1417
    %v1482 = vpack.c.b16 %v1420, %v1418
    %v1483 = vpack.c.b16 %v1423, %v1421
    %v1484 = vpack.c.b16 %v1424, %v1422
    %v1485 = vpack.c.b16 %v1427, %v1425
    %v1486 = vpack.c.b16 %v1428, %v1426
    %v1487 = vpack.c.b16 %v1431, %v1429
    %v1488 = vpack.c.b16 %v1432, %v1430
    %v1489 = vpack.c.b16 %v1435, %v1433
    %v1490 = vpack.c.b16 %v1436, %v1434
    %v1491 = vpack.c.b16 %v1439, %v1437
    %v1492 = vpack.c.b16 %v1440, %v1438
    %v1493 = vpack.c.b16 %v1443, %v1441
    %v1494 = vpack.c.b16 %v1444, %v1442
    %v1495 = vpack.c.b16 %v1447, %v1445
    %v1496 = vpack.c.b16 %v1448, %v1446
    %v1497 = vpack.c.b16 %v1451, %v1449
    %v1498 = vpack.c.b16 %v1452, %v1450
    %v1499 = vpack.c.b16 %v1455, %v1453
    %v1500 = vpack.c.b16 %v1456, %v1454
    %v1501 = vpack.c.b16 %v1459, %v1457
    %v1502 = vpack.c.b16 %v1460, %v1458
    %v1503 = vpack.c.b16 %v1463, %v1461
    %v1504 = vpack.c.b16 %v1464, %v1462
    %v1505 = vpack.c.b16 %v1467, %v1465
    %v1506 = vpack.c.b16 %v1468, %v1466
    %v1507 = vpack.c.b16 %v1471, %v1469
    %v1508 = vpack.c.b16 %v1472, %v1470
    %v1509 = vpack.c.b16 %v1475, %v1473
    %v1510 = vpack.c.b16 %v1476, %v1474
    %v1511 = vpack.c.b16 %v1479, %v1477
    %v1512 = vpack.c.b16 %v1480, %v1478
    %1545 = vmatprep.subr.bf16.mxu0 %v1496
    %1546 = vmatpush1.bf16.msra.mxu0 %v1495
    %1547 = vmatprep.subr.bf16.mxu0 %v1494
    %1548 = vmatpush1.bf16.msra.mxu0 %v1493
    %1549 = vmatprep.subr.bf16.mxu0 %v1492
    %1550 = vmatpush1.bf16.msra.mxu0 %v1491
    %1551 = vmatprep.subr.bf16.mxu0 %v1490
    %1552 = vmatpush1.bf16.msra.mxu0 %v1489
    %1553 = vmatprep.subr.bf16.mxu0 %v1488
    %1554 = vmatpush1.bf16.msra.mxu0 %v1487
    %1555 = vmatprep.subr.bf16.mxu0 %v1486
    %1556 = vmatpush1.bf16.msra.mxu0 %v1485
    %1557 = vmatprep.subr.bf16.mxu0 %v1484
    %1558 = vmatpush1.bf16.msra.mxu0 %v1483
    %1559 = vmatprep.subr.bf16.mxu0 %v1482
    %1560 = vmatpush1.bf16.msra.mxu0 %v1481
    %1561 = vmatprep.subr.bf16.mxu0 %v1512
    %1562 = vmatpush2.bf16.msra.mxu0 %v1511
    %1563 = vmatprep.subr.bf16.mxu0 %v1510
    %1564 = vmatpush2.bf16.msra.mxu0 %v1509
    %1565 = vmatprep.subr.bf16.mxu0 %v1508
    %1566 = vmatpush2.bf16.msra.mxu0 %v1507
    %1567 = vmatprep.subr.bf16.mxu0 %v1506
    %1568 = vmatpush2.bf16.msra.mxu0 %v1505
    %1569 = vmatprep.subr.bf16.mxu0 %v1504
    %1570 = vmatpush2.bf16.msra.mxu0 %v1503
    %1571 = vmatprep.subr.bf16.mxu0 %v1502
    %1572 = vmatpush2.bf16.msra.mxu0 %v1501
    %1573 = vmatprep.subr.bf16.mxu0 %v1500
    %1574 = vmatpush2.bf16.msra.mxu0 %v1499
    %1575 = vmatprep.subr.bf16.mxu0 %v1498
    %1576 = vmatpush2.bf16.msra.mxu0 %v1497
    %1577 = vmatprep.mubr.bf16.mxu0 %v1352
    %1578 = vmatmul.mubr.bf16.gmra.mxu0 %v1351
    %v1579 = vpop.f32.mrf.mxu0
    %v1580 = vadd.f32 0.0, %v1579
    %v1581 = vpop.f32.mrf.mxu0
    %v1582 = vadd.f32 0.0, %v1581
    %v1583 = vpop.f32.mrf.mxu0
    %v1584 = vadd.f32 0.0, %v1583
    %v1585 = vpop.f32.mrf.mxu0
    %v1586 = vadd.f32 0.0, %v1585
    %1587 = vdwg.mxu0
    %v1588 = vadd.f32 %v1580, %v1584
    %v1589 = vrot.slane %v1588, 4
    %v1590 = vadd.f32 %v1588, %v1589
    %v1591 = vrot.slane %v1590, 2
    %v1592 = vadd.f32 %v1590, %v1591
    %v1593 = vrot.slane %v1592, 1
    %v1594 = vadd.f32 %v1592, %v1593
    %v1595 = vadd.f32 %v1582, %v1586
    %v1596 = vrot.slane %v1595, 4
    %v1597 = vadd.f32 %v1595, %v1596
    %v1598 = vrot.slane %v1597, 2
    %v1599 = vadd.f32 %v1597, %v1598
    %v1600 = vrot.slane %v1599, 1
    %v1601 = vadd.f32 %v1599, %v1600
    %v1602 = vmul.f32 %v1594, %v275
    %v1603 = vmul.f32 %v1601, %v275
    %v1604 = vmul.f32 %v1580, %v1580
    %v1605 = vmul.f32 %v1582, %v1582
    %v1606 = vmul.f32 %v1584, %v1584
    %v1607 = vmul.f32 %v1586, %v1586
    %v1608 = vadd.f32 %v1604, %v1606
    %v1609 = vrot.slane %v1608, 4
    %v1610 = vadd.f32 %v1608, %v1609
    %v1611 = vrot.slane %v1610, 2
    %v1612 = vadd.f32 %v1610, %v1611
    %v1613 = vrot.slane %v1612, 1
    %v1614 = vadd.f32 %v1612, %v1613
    %v1615 = vadd.f32 %v1605, %v1607
    %v1616 = vrot.slane %v1615, 4
    %v1617 = vadd.f32 %v1615, %v1616
    %v1618 = vrot.slane %v1617, 2
    %v1619 = vadd.f32 %v1617, %v1618
    %v1620 = vrot.slane %v1619, 1
    %v1621 = vadd.f32 %v1619, %v1620
    %v1622 = vmul.f32 %v1614, %v275
    %v1623 = vmul.f32 %v1621, %v275
    %v1624 = vmul.f32 %v1602, %v1602
    %v1625 = vmul.f32 %v1603, %v1603
    %v1626 = vsub.f32 %v1622, %v1624
    %v1627 = vsub.f32 %v1623, %v1625
    %v1628 = vmax.f32 %v1626, 0.0
    %v1629 = vmax.f32 %v1627, 0.0
    %v1630 = vadd.f32 %v1628, 1e-05
    %v1631 = vadd.f32 %v1629, 1e-05
    %v1632 = vrsqrt.pop %v1630
    %v1633 = vrsqrt.pop %v1631
    %v1634 = vsub.f32 0.0, %v1602
    %v1635 = vsub.f32 0.0, %v1603
    %v1636 = vmul.f32 %v1634, %v1632
    %v1637 = vmul.f32 %v1635, %v1633
    %v1638 = vmul.f32 %v1580, %v1632
    %v1639 = vmul.f32 %v1582, %v1633
    %v1640 = vmul.f32 %v1584, %v1632
    %v1641 = vmul.f32 %v1586, %v1633
    %v1642 = vadd.f32 %v1638, %v1636
    %v1643 = vadd.f32 %v1639, %v1637
    %v1644 = vadd.f32 %v1640, %v1636
    %v1645 = vadd.f32 %v1641, %v1637
    %v1646 = vpack.c.bf16 %v1644, %v1642
    %v1647 = vpack.c.bf16 %v1645, %v1643
    %v1648 = vld [vmem:[#allocation3] sm:$0xf]
    %v1649 = vld [vmem:[#allocation3 + $0x4] sm:$0xf]
    %v1650 = vld [vmem:[#allocation3 + $0x8] sm:$0xf]
    %v1651 = vld [vmem:[#allocation3 + $0xc] sm:$0xf]
    %v1652 = vld [vmem:[#allocation3 + $0x10] sm:$0xf]
    %v1653 = vld [vmem:[#allocation3 + $0x14] sm:$0xf]
    %v1654 = vld [vmem:[#allocation3 + $0x18] sm:$0xf]
    %v1655 = vld [vmem:[#allocation3 + $0x1c] sm:$0xf]
    %v1656 = vld [vmem:[#allocation3 + $0x20] sm:$0xf]
    %v1657 = vld [vmem:[#allocation3 + $0x24] sm:$0xf]
    %v1658 = vld [vmem:[#allocation3 + $0x28] sm:$0xf]
    %v1659 = vld [vmem:[#allocation3 + $0x2c] sm:$0xf]
    %v1660 = vld [vmem:[#allocation3 + $0x30] sm:$0xf]
    %v1661 = vld [vmem:[#allocation3 + $0x34] sm:$0xf]
    %v1662 = vld [vmem:[#allocation3 + $0x38] sm:$0xf]
    %v1663 = vld [vmem:[#allocation3 + $0x3c] sm:$0xf]
    %v1664 = vld [vmem:[#allocation3 + $0x40] sm:$0xf]
    %v1665 = vld [vmem:[#allocation3 + $0x44] sm:$0xf]
    %v1666 = vld [vmem:[#allocation3 + $0x48] sm:$0xf]
    %v1667 = vld [vmem:[#allocation3 + $0x4c] sm:$0xf]
    %v1668 = vld [vmem:[#allocation3 + $0x50] sm:$0xf]
    %v1669 = vld [vmem:[#allocation3 + $0x54] sm:$0xf]
    %v1670 = vld [vmem:[#allocation3 + $0x58] sm:$0xf]
    %v1671 = vld [vmem:[#allocation3 + $0x5c] sm:$0xf]
    %v1672 = vld [vmem:[#allocation3 + $0x60] sm:$0xf]
    %v1673 = vld [vmem:[#allocation3 + $0x64] sm:$0xf]
    %v1674 = vld [vmem:[#allocation3 + $0x68] sm:$0xf]
    %v1675 = vld [vmem:[#allocation3 + $0x6c] sm:$0xf]
    %v1676 = vld [vmem:[#allocation3 + $0x70] sm:$0xf]
    %v1677 = vld [vmem:[#allocation3 + $0x74] sm:$0xf]
    %v1678 = vld [vmem:[#allocation3 + $0x78] sm:$0xf]
    %v1679 = vld [vmem:[#allocation3 + $0x7c] sm:$0xf]
    %v1712 = vunpack.c.l.b16 %v1648
    %v1713 = vunpack.c.l.b16 %v1649
    %v1714 = vunpack.c.l.b16 %v1650
    %v1715 = vunpack.c.l.b16 %v1651
    %v1716 = vunpack.c.l.b16 %v1652
    %v1717 = vunpack.c.l.b16 %v1653
    %v1718 = vunpack.c.l.b16 %v1654
    %v1719 = vunpack.c.l.b16 %v1655
    %v1720 = vunpack.c.l.b16 %v1656
    %v1721 = vunpack.c.l.b16 %v1657
    %v1722 = vunpack.c.l.b16 %v1658
    %v1723 = vunpack.c.l.b16 %v1659
    %v1724 = vunpack.c.l.b16 %v1660
    %v1725 = vunpack.c.l.b16 %v1661
    %v1726 = vunpack.c.l.b16 %v1662
    %v1727 = vunpack.c.l.b16 %v1663
    %v1728 = vunpack.c.l.b16 %v1664
    %v1729 = vunpack.c.l.b16 %v1665
    %v1730 = vunpack.c.l.b16 %v1666
    %v1731 = vunpack.c.l.b16 %v1667
    %v1732 = vunpack.c.l.b16 %v1668
    %v1733 = vunpack.c.l.b16 %v1669
    %v1734 = vunpack.c.l.b16 %v1670
    %v1735 = vunpack.c.l.b16 %v1671
    %v1736 = vunpack.c.l.b16 %v1672
    %v1737 = vunpack.c.l.b16 %v1673
    %v1738 = vunpack.c.l.b16 %v1674
    %v1739 = vunpack.c.l.b16 %v1675
    %v1740 = vunpack.c.l.b16 %v1676
    %v1741 = vunpack.c.l.b16 %v1677
    %v1742 = vunpack.c.l.b16 %v1678
    %v1743 = vunpack.c.l.b16 %v1679
    %v1744 = vpack.c.b16 %v1713, %v1712
    %v1745 = vpack.c.b16 %v1715, %v1714
    %v1746 = vpack.c.b16 %v1717, %v1716
    %v1747 = vpack.c.b16 %v1719, %v1718
    %v1748 = vpack.c.b16 %v1721, %v1720
    %v1749 = vpack.c.b16 %v1723, %v1722
    %v1750 = vpack.c.b16 %v1725, %v1724
    %v1751 = vpack.c.b16 %v1727, %v1726
    %v1752 = vpack.c.b16 %v1729, %v1728
    %v1753 = vpack.c.b16 %v1731, %v1730
    %v1754 = vpack.c.b16 %v1733, %v1732
    %v1755 = vpack.c.b16 %v1735, %v1734
    %v1756 = vpack.c.b16 %v1737, %v1736
    %v1757 = vpack.c.b16 %v1739, %v1738
    %v1758 = vpack.c.b16 %v1741, %v1740
    %v1759 = vpack.c.b16 %v1743, %v1742
    %1776 = vmatprep.subr.bf16.mxu0 0
    %1777 = vmatpush1.bf16.msra.mxu0 %v1751
    %1778 = vmatprep.subr.bf16.mxu0 0
    %1779 = vmatpush1.bf16.msra.mxu0 %v1750
    %1780 = vmatprep.subr.bf16.mxu0 0
    %1781 = vmatpush1.bf16.msra.mxu0 %v1749
    %1782 = vmatprep.subr.bf16.mxu0 0
    %1783 = vmatpush1.bf16.msra.mxu0 %v1748
    %1784 = vmatprep.subr.bf16.mxu0 0
    %1785 = vmatpush1.bf16.msra.mxu0 %v1747
    %1786 = vmatprep.subr.bf16.mxu0 0
    %1787 = vmatpush1.bf16.msra.mxu0 %v1746
    %1788 = vmatprep.subr.bf16.mxu0 0
    %1789 = vmatpush1.bf16.msra.mxu0 %v1745
    %1790 = vmatprep.subr.bf16.mxu0 0
    %1791 = vmatpush1.bf16.msra.mxu0 %v1744
    %1792 = vmatprep.subr.bf16.mxu0 0
    %1793 = vmatpush2.bf16.msra.mxu0 %v1759
    %1794 = vmatprep.subr.bf16.mxu0 0
    %1795 = vmatpush2.bf16.msra.mxu0 %v1758
    %1796 = vmatprep.subr.bf16.mxu0 0
    %1797 = vmatpush2.bf16.msra.mxu0 %v1757
    %1798 = vmatprep.subr.bf16.mxu0 0
    %1799 = vmatpush2.bf16.msra.mxu0 %v1756
    %1800 = vmatprep.subr.bf16.mxu0 0
    %1801 = vmatpush2.bf16.msra.mxu0 %v1755
    %1802 = vmatprep.subr.bf16.mxu0 0
    %1803 = vmatpush2.bf16.msra.mxu0 %v1754
    %1804 = vmatprep.subr.bf16.mxu0 0
    %1805 = vmatpush2.bf16.msra.mxu0 %v1753
    %1806 = vmatprep.subr.bf16.mxu0 0
    %1807 = vmatpush2.bf16.msra.mxu0 %v1752
    %1808 = vmatprep.mubr.bf16.mxu0 %v1647
    %1809 = vmatmul.mubr.bf16.gmra.mxu0 %v1646
    %v1810 = vpop.f32.mrf.mxu0
    %v1811 = vadd.f32 0.0, %v1810
    %v1812 = vpop.f32.mrf.mxu0
    %v1813 = vpop.f32.mrf.mxu0
    %v1814 = vadd.f32 0.0, %v1813
    %v1815 = vpop.f32.mrf.mxu0
    %1816 = vdwg.mxu0
    %v1817 = vadd.f32 %v1811, %v1814
    %v1818 = vrot.slane %v1817, 4
    %v1819 = vadd.f32 %v1817, %v1818
    %v1820 = vrot.slane %v1819, 2
    %v1821 = vadd.f32 %v1819, %v1820
    %v1822 = vrot.slane %v1821, 1
    %v1823 = vadd.f32 %v1821, %v1822
    %v1824 = vmul.f32 %v1823, %v275
    %v1825 = vmul.f32 %v1811, %v1811
    %v1826 = vmul.f32 %v1814, %v1814
    %v1827 = vadd.f32 %v1825, %v1826
    %v1828 = vrot.slane %v1827, 4
    %v1829 = vadd.f32 %v1827, %v1828
    %v1830 = vrot.slane %v1829, 2
    %v1831 = vadd.f32 %v1829, %v1830
    %v1832 = vrot.slane %v1831, 1
    %v1833 = vadd.f32 %v1831, %v1832
    %v1834 = vmul.f32 %v1833, %v275
    %v1835 = vmul.f32 %v1824, %v1824
    %v1836 = vsub.f32 %v1834, %v1835
    %v1837 = vmax.f32 %v1836, 0.0
    %v1838 = vadd.f32 %v1837, 1e-05
    %v1839 = vrsqrt.pop %v1838
    %v1840 = vmul.f32 %v1839, %v116
    %v1841 = vmul.f32 %v1824, %v1840
    %v1842 = vsub.f32 %v117, %v1841
    %v1843 = vlaneseq
    %v1844 = vshrl.u32 %v1843, 7
    %v1845 = vsub.s32 0, %v1844
    %v1846 = vrot.slane %v1840, %v1845
    %v1847 = vmul.f32 %v1811, %v1846
    %v1848 = vmul.f32 %v1814, %v1846
    %v1850 = vlaneseq
    %v1851 = vshrl.u32 %v1850, 7
    %v1852 = vsub.s32 0, %v1851
    %v1853 = vrot.slane %v1842, %v1852
    %v1855 = vadd.f32 %v1847, %v1853
    %v1856 = vadd.f32 %v1848, %v1853
    %v1857 = vmax.f32 %v1855, 0.0
    %v1858 = vmax.f32 %v1856, 0.0
    %v1859 = vpack.c.bf16 %v1858, %v1857
    %1860 = vmatprep.subr.bf16.mxu0 %v983
    %1861 = vmatpush1.bf16.msra.mxu0 %v982
    %1862 = vmatprep.subr.bf16.mxu0 %v981
    %1863 = vmatpush1.bf16.msra.mxu0 %v980
    %1864 = vmatprep.subr.bf16.mxu0 %v979
    %1865 = vmatpush1.bf16.msra.mxu0 %v978
    %1866 = vmatprep.subr.bf16.mxu0 %v977
    %1867 = vmatpush1.bf16.msra.mxu0 %v976
    %1868 = vmatprep.subr.bf16.mxu0 %v975
    %1869 = vmatpush1.bf16.msra.mxu0 %v974
    %1870 = vmatprep.subr.bf16.mxu0 %v973
    %1871 = vmatpush1.bf16.msra.mxu0 %v972
    %1872 = vmatprep.subr.bf16.mxu0 %v971
    %1873 = vmatpush1.bf16.msra.mxu0 %v970
    %1874 = vmatprep.subr.bf16.mxu0 %v969
    %1875 = vmatpush1.bf16.msra.mxu0 %v968
    %1876 = vmatprep.subr.bf16.mxu0 0
    %1877 = vmatpush2.bf16.msra.mxu0 0
    %1878 = vmatprep.subr.bf16.mxu0 0
    %1879 = vmatpush2.bf16.msra.mxu0 0
    %1880 = vmatprep.subr.bf16.mxu0 0
    %1881 = vmatpush2.bf16.msra.mxu0 0
    %1882 = vmatprep.subr.bf16.mxu0 0
    %1883 = vmatpush2.bf16.msra.mxu0 0
    %1884 = vmatprep.subr.bf16.mxu0 0
    %1885 = vmatpush2.bf16.msra.mxu0 0
    %1886 = vmatprep.subr.bf16.mxu0 0
    %1887 = vmatpush2.bf16.msra.mxu0 0
    %1888 = vmatprep.subr.bf16.mxu0 0
    %1889 = vmatpush2.bf16.msra.mxu0 0
    %1890 = vmatprep.subr.bf16.mxu0 0
    %1891 = vmatpush2.bf16.msra.mxu0 0
    %1892 = vmatprep.mubr.bf16.mxu0 0
    %1893 = vmatmul.mubr.bf16.gmra.mxu0 %v1859
    %v1894 = vpop.f32.mrf.mxu0
    %v1895 = vadd.f32 %v913, %v1894
    %v1896 = vpop.f32.mrf.mxu0
    %v1897 = vadd.f32 %v917, %v1896
    %v1898 = vpop.f32.mrf.mxu0
    %v1899 = vadd.f32 %v913, %v1898
    %v1900 = vpop.f32.mrf.mxu0
    %v1901 = vadd.f32 %v917, %v1900
    %1902 = vdwg.mxu0
    %v1903 = vmul.f32 %v1642, %v1642
    %v1904 = vmul.f32 %v1643, %v1643
    %v1905 = vmul.f32 %v1644, %v1644
    %v1906 = vmul.f32 %v1645, %v1645
    %v1907 = vadd.f32 %v1903, %v1904
    %1908 = vadd.xlane.f32.xlu0 %v1907
    %v1909 = vpop.xlane.xlu0 %1908
    %v1910 = vadd.f32 %v1905, %v1906
    %1911 = vadd.xlane.f32.xlu0 %v1910
    %v1912 = vpop.xlane.xlu0 %1911
    %v1913 = vmax.f32 %v1909, 1e-24
    %v1914 = vmax.f32 %v1912, 1e-24
    %v1915 = vrsqrt.pop %v1913
    %v1916 = vrsqrt.pop %v1914
    %v1917 = vmul.f32 %v1642, %v1915
    %v1918 = vmul.f32 %v1643, %v1915
    %v1919 = vmul.f32 %v1644, %v1916
    %v1920 = vmul.f32 %v1645, %v1916
    %v1921 = vmul.f32 %v1895, %v1895
    %v1922 = vmul.f32 %v1897, %v1897
    %v1923 = vmul.f32 %v1899, %v1899
    %v1924 = vmul.f32 %v1901, %v1901
    %v1925 = vadd.f32 %v1921, %v1922
    %1926 = vadd.xlane.f32.xlu0 %v1925
    %v1927 = vpop.xlane.xlu0 %1926
    %v1928 = vadd.f32 %v1923, %v1924
    %1929 = vadd.xlane.f32.xlu0 %v1928
    %v1930 = vpop.xlane.xlu0 %1929
    %v1931 = vmax.f32 %v1927, 1e-24
    %v1932 = vmax.f32 %v1930, 1e-24
    %v1933 = vrsqrt.pop %v1931
    %v1934 = vrsqrt.pop %v1932
    %v1935 = vmul.f32 %v1895, %v1933
    %v1936 = vmul.f32 %v1897, %v1933
    %v1937 = vmul.f32 %v1899, %v1934
    %v1938 = vmul.f32 %v1901, %v1934
    %v1939 = vmul.f32 %v1917, 20.0
    %v1940 = vmul.f32 %v1918, 20.0
    %v1941 = vmul.f32 %v1919, 20.0
    %v1942 = vmul.f32 %v1920, 20.0
    %v1943 = vmul.f32 %v1939, 1.442695
    %v1944 = vpow.pop %v1943
    %v1945 = vmul.f32 %v1940, 1.442695
    %v1946 = vpow.pop %v1945
    %v1947 = vmul.f32 %v1941, 1.442695
    %v1948 = vpow.pop %v1947
    %v1949 = vmul.f32 %v1942, 1.442695
    %v1950 = vpow.pop %v1949
    %v1951 = vadd.f32 %v1944, %v1946
    %1952 = vadd.xlane.f32.xlu0 %v1951
    %v1953 = vpop.xlane.xlu0 %1952
    %v1954 = vadd.f32 %v1948, %v1950
    %1955 = vadd.xlane.f32.xlu0 %v1954
    %v1956 = vpop.xlane.xlu0 %1955
    %v1957 = vrcp.pop %v1953
    %v1958 = vmul.f32 1.0, %v1957
    %v1959 = vrcp.pop %v1956
    %v1960 = vmul.f32 1.0, %v1959
    %v1961 = vmul.f32 %v1944, %v1958
    %v1962 = vmul.f32 %v1946, %v1958
    %v1963 = vmul.f32 %v1948, %v1960
    %v1964 = vmul.f32 %v1950, %v1960
    %v1965 = vunpack.c.l.bf16 %v1061
    %v1966 = vunpack.c.l.bf16 %v1062
    %v1967 = vunpack.c.h.bf16 %v1061
    %v1968 = vunpack.c.h.bf16 %v1062
    %v1969 = vmul.f32 %v1965, %v1917
    %v1970 = vmul.f32 %v1966, %v1918
    %v1971 = vmul.f32 %v1967, %v1919
    %v1972 = vmul.f32 %v1968, %v1920
    %v1973 = vadd.f32 %v1969, %v1970
    %1974 = vadd.xlane.f32.xlu0 %v1973
    %v1975 = vpop.xlane.xlu0 %1974
    %v1976 = vadd.f32 %v1971, %v1972
    %1977 = vadd.xlane.f32.xlu0 %v1976
    %v1978 = vpop.xlane.xlu0 %1977
    %v1979 = vadd.f32 %v1975, %v1978
    %v1980 = vrot.slane %v1979, 4
    %v1981 = vadd.f32 %v1979, %v1980
    %v1982 = vrot.slane %v1981, 2
    %v1983 = vadd.f32 %v1981, %v1982
    %v1984 = vrot.slane %v1983, 1
    %v1985 = vadd.f32 %v1983, %v1984
    %v1986 = vmul.f32 %v1985, %v275
    %v1987 = vmul.f32 %v1961, %v1961
    %v1988 = vmul.f32 %v1962, %v1962
    %v1989 = vmul.f32 %v1963, %v1963
    %v1990 = vmul.f32 %v1964, %v1964
    %v1991 = vadd.f32 %v1987, %v1988
    %1992 = vadd.xlane.f32.xlu0 %v1991
    %v1993 = vpop.xlane.xlu0 %1992
    %v1994 = vadd.f32 %v1989, %v1990
    %1995 = vadd.xlane.f32.xlu0 %v1994
    %v1996 = vpop.xlane.xlu0 %1995
    %v1997 = vrsqrt.pop %v1993
    %v1998 = vmul.f32 %v1993, %v1997
    %vm1999 = vcmp.eq.f32.partialorder %v1993, inf
    %v2000 = vsel %vm1999, %v1993, %v1998
    %vm2001 = vcmp.eq.f32.partialorder %v1993, 0.0
    %v2002 = vand.u32 %v1993, 2147483648
    %v2003 = vsel %vm2001, %v2002, %v2000
    %v2004 = vrsqrt.pop %v1996
    %v2005 = vmul.f32 %v1996, %v2004
    %vm2006 = vcmp.eq.f32.partialorder %v1996, inf
    %v2007 = vsel %vm2006, %v1996, %v2005
    %vm2008 = vcmp.eq.f32.partialorder %v1996, 0.0
    %v2009 = vand.u32 %v1996, 2147483648
    %v2010 = vsel %vm2008, %v2009, %v2007
    %v2011 = vadd.f32 %v2003, %v2010
    %v2012 = vrot.slane %v2011, 4
    %v2013 = vadd.f32 %v2011, %v2012
    %v2014 = vrot.slane %v2013, 2
    %v2015 = vadd.f32 %v2013, %v2014
    %v2016 = vrot.slane %v2015, 1
    %v2017 = vadd.f32 %v2015, %v2016
    %v2018 = vmul.f32 %v2017, %v275
    %v2019 = vmul.f32 %v1961, %v1965
    %v2020 = vmul.f32 %v1962, %v1966
    %v2021 = vmul.f32 %v1963, %v1967
    %v2022 = vmul.f32 %v1964, %v1968
    %v2023 = vadd.f32 %v2019, %v2020
    %2024 = vadd.xlane.f32.xlu0 %v2023
    %v2025 = vpop.xlane.xlu0 %2024
    %v2026 = vadd.f32 %v2021, %v2022
    %2027 = vadd.xlane.f32.xlu0 %v2026
    %v2028 = vpop.xlane.xlu0 %2027
    %v2029 = vadd.f32 %v2025, %v2028
    %v2030 = vrot.slane %v2029, 4
    %v2031 = vadd.f32 %v2029, %v2030
    %v2032 = vrot.slane %v2031, 2
    %v2033 = vadd.f32 %v2031, %v2032
    %v2034 = vrot.slane %v2033, 1
    %v2035 = vadd.f32 %v2033, %v2034
    %v2036 = vmul.f32 %v2035, %v275
    %v2037 = vsub.f32 0.0, %v2036
    %v2038 = vmul.f32 %v2037, 10.0
    %v2039 = vunpack.c.l.bf16 %v1107
    %v2040 = vunpack.c.l.bf16 %v1108
    %v2041 = vunpack.c.h.bf16 %v1107
    %v2042 = vunpack.c.h.bf16 %v1108
    %v2043 = vmul.f32 %v2039, %v1935
    %v2044 = vmul.f32 %v2040, %v1936
    %v2045 = vmul.f32 %v2041, %v1937
    %v2046 = vmul.f32 %v2042, %v1938
    %v2047 = vadd.f32 %v2043, %v2044
    %2048 = vadd.xlane.f32.xlu0 %v2047
    %v2049 = vpop.xlane.xlu0 %2048
    %v2050 = vadd.f32 %v2045, %v2046
    %2051 = vadd.xlane.f32.xlu0 %v2050
    %v2052 = vpop.xlane.xlu0 %2051
    %v2053 = vadd.f32 %v2049, %v2052
    %v2054 = vrot.slane %v2053, 4
    %v2055 = vadd.f32 %v2053, %v2054
    %v2056 = vrot.slane %v2055, 2
    %v2057 = vadd.f32 %v2055, %v2056
    %v2058 = vrot.slane %v2057, 1
    %v2059 = vadd.f32 %v2057, %v2058
    %v2060 = vmul.f32 %v2059, %v275
    %v2061 = vsub.f32 0.0, %v2060
    %v2062 = vmul.f32 %v2061, 10.0
    %v2063 = vadd.f32 %v2038, %v2062
    %v2064 = vmul.f32 %v2063, 0.5
    %v2065 = vadd.f32 %v2064, 0.0
    %vm2066 = vcmask 0
    %2067 = vst.msk [vmem:[#allocation12] sm:$0x1] %vm2066, %v2065
    %2068 = vst.msk [vmem:[#allocation13] sm:$0x1] %vm2066, %v1986
    %2069 = vst.msk [vmem:[#allocation15] sm:$0x1] %vm2066, %v2018
    // Predicated region
    $region58: #{tpu_custom_call.1} parent=1 // pred_check
      _
    $region59: #{tpu_custom_call.1} parent=1 // pred_check_branch
      %2071 = sbr.rel (0) target = $region61
    $region60: #{tpu_custom_call.1} parent=1 // pred_region
      %s2073 = ssub.s32 16, 16
      %2074 = vsyncadd [#allocation8], %s2073
      %s2076 = sshll.u32 [#allocation12], 4
      %s2077 = int_to_ptr.vmem [resolvable:$true] %s2076
      %2079 = dma.vmem_to_hbm [thread:$0]  %s2077, 16, %s11, [#allocation8]
    $region61: #{tpu_custom_call.1} parent=1 // pred_fallthru
      _
    // Predicated region
    $region62: #{tpu_custom_call.1} parent=1 // pred_check
      _
    $region63: #{tpu_custom_call.1} parent=1 // pred_check_branch
      %2081 = sbr.rel (0) target = $region65
    $region64: #{tpu_custom_call.1} parent=1 // pred_region
      %s2083 = ssub.s32 16, 16
      %2084 = vsyncadd [#allocation14], %s2083
      %s2086 = sshll.u32 [#allocation13], 4
      %s2087 = int_to_ptr.vmem [resolvable:$true] %s2086
      %2089 = dma.vmem_to_hbm [thread:$0]  %s2087, 16, %s12, [#allocation14]
    $region65: #{tpu_custom_call.1} parent=1 // pred_fallthru
      _
    // Predicated region
    $region66: #{tpu_custom_call.1} parent=1 // pred_check
      _
    $region67: #{tpu_custom_call.1} parent=1 // pred_check_branch
      %2091 = sbr.rel (0) target = $region69
    $region68: #{tpu_custom_call.1} parent=1 // pred_region
      %s2093 = ssub.s32 16, 16
      %2094 = vsyncadd [#allocation14], %s2093
      %s2096 = sshll.u32 [#allocation15], 4
      %s2097 = int_to_ptr.vmem [resolvable:$true] %s2096
      %2099 = dma.vmem_to_hbm [thread:$0]  %s2097, 16, %s13, [#allocation14]
    $region69: #{tpu_custom_call.1} parent=1 // pred_fallthru
      _
    // Predicated region
    $region70: #{tpu_custom_call.1} parent=1 // pred_check
      _
    $region71: #{tpu_custom_call.1} parent=1 // pred_check_branch
      %2101 = sbr.rel (0) target = $region73
    $region72: #{tpu_custom_call.1} parent=1 // pred_region
      %2102 = dma.done [#allocation8], 16
    $region73: #{tpu_custom_call.1} parent=1 // pred_fallthru
      _
    // Predicated region
    $region74: #{tpu_custom_call.1} parent=1 // pred_check
      _
    $region75: #{tpu_custom_call.1} parent=1 // pred_check_branch
      %2104 = sbr.rel (0) target = $region77
    $region76: #{tpu_custom_call.1} parent=1 // pred_region
      %2105 = dma.done [#allocation14], 16
    $region77: #{tpu_custom_call.1} parent=1 // pred_fallthru
      _
    // Predicated region
    $region78: #{tpu_custom_call.1} parent=1 // pred_check
      _
    $region79: #{tpu_custom_call.1} parent=1 // pred_check_branch
      %2107 = sbr.rel (0) target = $region81
    $region80: #{tpu_custom_call.1} parent=1 // pred_region
      %2108 = dma.done [#allocation14], 16
    $region81: #{tpu_custom_call.1} parent=1 // pred_fallthru
      _
    %2109 = vsyncpa [#allocation7], 1
    %2110 = vsyncpa [#allocation10], 1
    %2111 = vsyncpa [#allocation8], 1
    %2112 = vsyncpa [#allocation14], 1
  %2113 = vsyncmov [#allocation5]
  %s2114 = vpop.sfrf %2113
  %p2115 = scmp.eq.s32.totalorder %s2114, 0
  %p2116 = pneg %p2115
  %2118 = shalt.err (%p2116)
  %s2119 = scalar_lea.sflag [#allocation5], 1
  %2120 = vsyncmov %s2119
  %s2121 = vpop.sfrf %2120
  %p2122 = scmp.eq.s32.totalorder %s2121, 0
  %p2123 = pneg %p2122
  %2125 = shalt.err (%p2123)
  %s2126 = scalar_lea.sflag [#allocation5], 2
  %2127 = vsyncmov %s2126
  %s2128 = vpop.sfrf %2127
  %p2129 = scmp.eq.s32.totalorder %s2128, 0
  %p2130 = pneg %p2129
  %2132 = shalt.err (%p2130)

</llo_original>
